<compile_context>
chip_gen: v6e
topology: v6e:2x2x1
jax: 0.10.0
libtpu: 0.0.40
codegen_flags: <defaults>
</compile_context>

<pallas_src>
import functools

import jax
import jax.numpy as jnp
from jax.experimental import pallas as pl
from jax.experimental.pallas import tpu as pltpu


def _round_up(x, m):
    return ((x + m - 1) // m) * m


def _bf16_compute_ok():
    # bf16 VPU/EUP exists on v6e / v7x; v5e (and older) lack it -> keep f32 there.
    try:
        kind = jax.devices()[0].device_kind.lower()
    except Exception:
        return False
    return any(tag in kind for tag in ("v6", "v7", "7x"))


def _resolve_compute_dtype(requested):
    if requested is None:
        return jnp.dtype(jnp.bfloat16) if _bf16_compute_ok() else jnp.dtype(jnp.float32)
    requested = jnp.dtype(requested)
    if requested == jnp.dtype(jnp.bfloat16) and not _bf16_compute_ok():
        return jnp.dtype(jnp.float32)   # guard: v5e has no bf16 VPU/EUP
    return requested


def _discriminator_kernel(s_ref, a_ref, w1s_ref, ew1a_ref, b1_ref,
                          w2_ref, b2_ref, w3t_ref, b3_ref, out_ref,
                          *, a_pad, compute_dtype):
    cdt = compute_dtype
    states = s_ref[...]                                   # [TB, S], already compute dtype
    acts = a_ref[...]                                      # [TB, 1] int32

    # Embedding lookup folded through W1: emb(a) @ W1_act == one_hot(a) @ (emb @ W1_act).
    hot = (acts == jax.lax.broadcasted_iota(
        jnp.int32, (acts.shape[0], a_pad), 1)).astype(cdt)           # [TB, A_pad]

    h1 = (jnp.dot(states, w1s_ref[...], preferred_element_type=jnp.float32)
          + jnp.dot(hot, ew1a_ref[...], preferred_element_type=jnp.float32)
          + b1_ref[...])                                             # [TB, H] f32 acc
    h1 = jnp.tanh(h1.astype(cdt))                                    # [TB, H]

    h2 = jnp.dot(h1, w2_ref[...], preferred_element_type=jnp.float32) + b2_ref[...]
    h2 = jnp.tanh(h2.astype(cdt))                                    # [TB, H]

    # Head Linear(H, 1) evaluated directly in lane-dense [1, TB] row layout:
    # contract H of w3t [1, H] against H of h2 [TB, H]  ->  [1, TB].
    logits = jax.lax.dot_general(
        w3t_ref[...], h2, (((1,), (1,)), ((), ())),
        preferred_element_type=jnp.float32) + b3_ref[...]            # [1, TB] f32
    out_ref[...] = jax.nn.sigmoid(logits).astype(out_ref.dtype)      # dense unmasked store


def discrete_discriminator_forward(states, actions, params, *,
                                   block_b=512, compute_dtype=None):
    """states: [B, state_dim] f32, actions: [B] int.  Returns sigmoid(logits): [B, 1]."""
    emb = params["emb"]                       # [A, S]
    w1 = params["w1"]                         # [2S, H]
    action_dim, state_dim = emb.shape
    hidden_dim = w1.shape[1]
    cdt = _resolve_compute_dtype(compute_dtype)

    states = jnp.asarray(states, jnp.float32).reshape(-1, state_dim)   # torch .view(-1, S)
    actions = jnp.asarray(actions).reshape(-1).astype(jnp.int32)        # torch .long()
    B = states.shape[0]

    # ---- one-time parameter prep (cheap; cacheable across calls) -----------------
    a_pad = max(8, _round_up(action_dim, 8))          # whole sublane group for the one-hot K
    w1_s = w1[:state_dim]                             # [S, H]
    w1_a = w1[state_dim:]                             # [S, H]
    ew1a = jnp.zeros((a_pad, hidden_dim), jnp.float32).at[:action_dim].set(
        emb.astype(jnp.float32) @ w1_a.astype(jnp.float32))            # [A_pad, H]
    w3t = params["w3"].reshape(1, hidden_dim)                          # head as a [1, H] row
    b1 = params["b1"].reshape(1, hidden_dim).astype(jnp.float32)
    b2 = params["b2"].reshape(1, hidden_dim).astype(jnp.float32)
    b3 = params["b3"].reshape(1, 1).astype(jnp.float32)
    # Pre-cast resident operands once -> no per-grid-step casts inside the kernel.
    w1_s = w1_s.astype(cdt)
    ew1a = ew1a.astype(cdt)
    w2 = params["w2"].astype(cdt)
    w3t = w3t.astype(cdt)

    # ---- batch tiling -------------------------------------------------------------
    block_b = max(128, min(_round_up(block_b, 128), _round_up(B, 128)))
    num_blocks = pl.cdiv(B, block_b)
    Bp = num_blocks * block_b
    states = states.astype(cdt)                       # bf16 states halve the dominant HBM read
    if Bp != B:
        states = jnp.pad(states, ((0, Bp - B), (0, 0)))
        actions = jnp.pad(actions, ((0, Bp - B),))    # padded rows use action 0; sliced away
    actions = actions.reshape(Bp, 1)

    def resident(a):  # constant index_map -> fetched into VMEM once, stays resident
        return pl.BlockSpec(a.shape, lambda i, _nd=a.ndim: (0,) * _nd)

    kernel = functools.partial(_discriminator_kernel, a_pad=a_pad, compute_dtype=cdt)

    out = pl.pallas_call(
        kernel,
        out_shape=jax.ShapeDtypeStruct((1, Bp), jnp.float32),
        grid=(num_blocks,),
        in_specs=[
            pl.BlockSpec((block_b, state_dim), lambda i: (i, 0)),   # states tile (moves)
            pl.BlockSpec((block_b, 1), lambda i: (i, 0)),           # actions tile (moves)
            resident(w1_s),
            resident(ew1a),
            resident(b1),
            resident(w2),
            resident(b2),
            resident(w3t),
            resident(b3),
        ],
        out_specs=pl.BlockSpec((1, block_b), lambda i: (0, i)),     # lane-dense over batch
        compiler_params=pltpu.CompilerParams(
            # Batch tiles shard across v7x's 2 TensorCores; no-op on v5e/v6e.
            # TODO(synk): if xprof shows one v7x TC idle, switch to pltpu.CORE_PARALLEL.
            dimension_semantics=("parallel",)),
    )(states, actions, w1_s, ew1a, b1, w2, b2, w3t, b3)

    return out[0, :B].reshape(B, 1)


def init_params(key, state_dim, action_dim, hidden_dim=4):
    """Mimics the torch module: Embedding ~ N(0,1); Linear ~ U(+-1/sqrt(fan_in)).
    Linear weights are stored [in, out] (transposed vs torch's [out, in])."""
    ks = jax.random.split(key, 7)

    def linear(kw, kb, fan_in, fan_out):
        bound = 1.0 / (fan_in ** 0.5)
        w = jax.random.uniform(kw, (fan_in, fan_out), jnp.float32, -bound, bound)
        b = jax.random.uniform(kb, (fan_out,), jnp.float32, -bound, bound)
        return w, b

    emb = jax.random.normal(ks[0], (action_dim, state_dim), jnp.float32)
    w1, b1 = linear(ks[1], ks[2], 2 * state_dim, hidden_dim)
    w2, b2 = linear(ks[3], ks[4], hidden_dim, hidden_dim)
    w3, b3 = linear(ks[5], ks[6], hidden_dim, 1)
    return {"emb": emb, "w1": w1, "b1": b1, "w2": w2, "b2": b2, "w3": w3, "b3": b3}


def _reference_module(states, actions, p):
    """Torch-faithful math: embedding gather + concat + sequential MLP."""
    emb = p["emb"][actions.astype(jnp.int32)]
    x = jnp.concatenate([states, emb], axis=-1)
    h1 = jnp.tanh(x @ p["w1"] + p["b1"])
    h2 = jnp.tanh(h1 @ p["w2"] + p["b2"])
    return jax.nn.sigmoid(h2 @ p["w3"] + p["b3"])


if __name__ == "__main__":
    key = jax.random.PRNGKey(0)
    k_s, k_a, k_p = jax.random.split(key, 3)

    B, state_dim, action_dim, hidden_dim = 1024, 16, 6, 32
    states = jax.random.normal(k_s, (B, state_dim), jnp.float32)
    actions = jax.random.randint(k_a, (B,), 0, action_dim, dtype=jnp.int32)
    params = init_params(k_p, state_dim, action_dim, hidden_dim)

    ref = _reference_module(states, actions, params)

    # f32 path: exact module semantics (modulo matmul accumulation order); all chips.
    out_f32 = jax.block_until_ready(
        discrete_discriminator_forward(states, actions, params,
                                       block_b=512, compute_dtype=jnp.float32))
    assert out_f32.shape == (B, 1)
    assert jnp.allclose(out_f32, ref, atol=1e-4, rtol=1e-4)

    # Auto dtype: bf16 operands on v6e/v7x (f32 accumulation), f32 fallback on v5e.
    out_auto = jax.block_until_ready(
        discrete_discriminator_forward(states, actions, params, block_b=512))
    assert out_auto.shape == (B, 1)
    assert jnp.allclose(out_auto, ref, atol=5e-2)

    print("KERNEL_OK")
</pallas_src>

<mosaic_0001>
module attributes {stable_mosaic.version = 11 : i64} {
  func.func @_discriminator_kernel(%arg0: i32, %arg1: memref<512x16xf32, #tpu.memory_space<vmem>>, %arg2: memref<512x1xi32, #tpu.memory_space<vmem>>, %arg3: memref<16x32xf32, #tpu.memory_space<vmem>>, %arg4: memref<8x32xf32, #tpu.memory_space<vmem>>, %arg5: memref<1x32xf32, #tpu.memory_space<vmem>>, %arg6: memref<32x32xf32, #tpu.memory_space<vmem>>, %arg7: memref<1x32xf32, #tpu.memory_space<vmem>>, %arg8: memref<1x32xf32, #tpu.memory_space<vmem>>, %arg9: memref<1x1xf32, #tpu.memory_space<vmem>>, %arg10: memref<1x512xf32, #tpu.memory_space<vmem>>) attributes {dimension_semantics = [#tpu.dimension_semantics<parallel>], iteration_bounds = array<i64: 2>, scalar_prefetch = 0 : i64, scratch_operands = 0 : i64, tpu.core_type = #tpu.core_type<tc>, window_params = [{transform_indices = @transform_0, window_bounds = array<i64: 512, 16>}, {transform_indices = @transform_1, window_bounds = array<i64: 512, 1>}, {pipeline_mode = #tpu.pipeline_mode<synchronous>, transform_indices = @transform_2, window_bounds = array<i64: 16, 32>}, {pipeline_mode = #tpu.pipeline_mode<synchronous>, transform_indices = @transform_3, window_bounds = array<i64: 8, 32>}, {pipeline_mode = #tpu.pipeline_mode<synchronous>, transform_indices = @transform_4, window_bounds = array<i64: 1, 32>}, {pipeline_mode = #tpu.pipeline_mode<synchronous>, transform_indices = @transform_5, window_bounds = array<i64: 32, 32>}, {pipeline_mode = #tpu.pipeline_mode<synchronous>, transform_indices = @transform_6, window_bounds = array<i64: 1, 32>}, {pipeline_mode = #tpu.pipeline_mode<synchronous>, transform_indices = @transform_7, window_bounds = array<i64: 1, 32>}, {pipeline_mode = #tpu.pipeline_mode<synchronous>, transform_indices = @transform_8, window_bounds = array<i64: 1, 1>}, {transform_indices = @transform_9, window_bounds = array<i64: 1, 512>}]} {
    %c0 = arith.constant 0 : index
    %c0_0 = arith.constant 0 : index
    %0 = vector.load %arg1[%c0, %c0_0] : memref<512x16xf32, #tpu.memory_space<vmem>>, vector<512x16xf32>
    %c0_1 = arith.constant 0 : index
    %c0_2 = arith.constant 0 : index
    %1 = vector.load %arg2[%c0_1, %c0_2] : memref<512x1xi32, #tpu.memory_space<vmem>>, vector<512x1xi32>
    %2 = tpu.iota {dimensions = array<i32: 1>} : vector<512x8xi32>
    %3 = vector.broadcast %1 : vector<512x1xi32> to vector<512x8xi32>
    %4 = arith.cmpi eq, %3, %2 : vector<512x8xi32>
    %5 = arith.extui %4 : vector<512x8xi1> to vector<512x8xi32>
    %6 = arith.sitofp %5 : vector<512x8xi32> to vector<512x8xf32>
    %c0_3 = arith.constant 0 : index
    %c0_4 = arith.constant 0 : index
    %7 = vector.load %arg3[%c0_3, %c0_4] : memref<16x32xf32, #tpu.memory_space<vmem>>, vector<16x32xf32>
    %cst = arith.constant dense<0.000000e+00> : vector<512x32xf32>
    %8 = tpu.matmul %0, %7, %cst {dimension_numbers = #tpu.dot_dimension_numbers<[1], [0], [0], [1], [0, 0, 1, 1], [], []>} : vector<512x16xf32>, vector<16x32xf32>, vector<512x32xf32> -> vector<512x32xf32>
    %c0_5 = arith.constant 0 : index
    %c0_6 = arith.constant 0 : index
    %9 = vector.load %arg4[%c0_5, %c0_6] : memref<8x32xf32, #tpu.memory_space<vmem>>, vector<8x32xf32>
    %cst_7 = arith.constant dense<0.000000e+00> : vector<512x32xf32>
    %10 = tpu.matmul %6, %9, %cst_7 {dimension_numbers = #tpu.dot_dimension_numbers<[1], [0], [0], [1], [0, 0, 1, 1], [], []>} : vector<512x8xf32>, vector<8x32xf32>, vector<512x32xf32> -> vector<512x32xf32>
    %11 = arith.addf %8, %10 : vector<512x32xf32>
    %c0_8 = arith.constant 0 : index
    %c0_9 = arith.constant 0 : index
    %12 = vector.load %arg5[%c0_8, %c0_9] : memref<1x32xf32, #tpu.memory_space<vmem>>, vector<1x32xf32>
    %13 = vector.broadcast %12 : vector<1x32xf32> to vector<512x32xf32>
    %14 = arith.addf %11, %13 : vector<512x32xf32>
    %15 = math.tanh %14 : vector<512x32xf32>
    %c0_10 = arith.constant 0 : index
    %c0_11 = arith.constant 0 : index
    %16 = vector.load %arg6[%c0_10, %c0_11] : memref<32x32xf32, #tpu.memory_space<vmem>>, vector<32x32xf32>
    %cst_12 = arith.constant dense<0.000000e+00> : vector<512x32xf32>
    %17 = tpu.matmul %15, %16, %cst_12 {dimension_numbers = #tpu.dot_dimension_numbers<[1], [0], [0], [1], [0, 0, 1, 1], [], []>} : vector<512x32xf32>, vector<32x32xf32>, vector<512x32xf32> -> vector<512x32xf32>
    %c0_13 = arith.constant 0 : index
    %c0_14 = arith.constant 0 : index
    %18 = vector.load %arg7[%c0_13, %c0_14] : memref<1x32xf32, #tpu.memory_space<vmem>>, vector<1x32xf32>
    %19 = vector.broadcast %18 : vector<1x32xf32> to vector<512x32xf32>
    %20 = arith.addf %17, %19 : vector<512x32xf32>
    %21 = math.tanh %20 : vector<512x32xf32>
    %c0_15 = arith.constant 0 : index
    %c0_16 = arith.constant 0 : index
    %22 = vector.load %arg8[%c0_15, %c0_16] : memref<1x32xf32, #tpu.memory_space<vmem>>, vector<1x32xf32>
    %cst_17 = arith.constant dense<0.000000e+00> : vector<1x512xf32>
    %23 = tpu.matmul %22, %21, %cst_17 {dimension_numbers = #tpu.dot_dimension_numbers<[1], [1], [0], [0], [0, 0, 1, 0], [], []>} : vector<1x32xf32>, vector<512x32xf32>, vector<1x512xf32> -> vector<1x512xf32>
    %c0_18 = arith.constant 0 : index
    %c0_19 = arith.constant 0 : index
    %24 = vector.load %arg9[%c0_18, %c0_19] : memref<1x1xf32, #tpu.memory_space<vmem>>, vector<1x1xf32>
    %25 = vector.broadcast %24 : vector<1x1xf32> to vector<1x512xf32>
    %26 = arith.addf %23, %25 : vector<1x512xf32>
    %27 = arith.negf %26 : vector<1x512xf32>
    %28 = math.exp %27 : vector<1x512xf32>
    %cst_20 = arith.constant 1.000000e+00 : f32
    %29 = vector.broadcast %cst_20 : f32 to vector<1x512xf32>
    %30 = arith.addf %29, %28 : vector<1x512xf32>
    %31 = arith.divf %29, %30 : vector<1x512xf32>
    %c0_21 = arith.constant 0 : index
    %c0_22 = arith.constant 0 : index
    %32 = vector.load %arg10[%c0_21, %c0_22] : memref<1x512xf32, #tpu.memory_space<vmem>>, vector<1x512xf32>
    tpu.vector_store %arg10[%c0_21, %c0_22], %31 {strides = array<i32>} : memref<1x512xf32, #tpu.memory_space<vmem>>, vector<1x512xf32>,
    return
  }
  func.func @transform_0(%arg0: i32) -> (i32, i32) {
    %c0_i32 = arith.constant 0 : i32
    %c0_i32_0 = arith.constant 0 : i32
    return %arg0, %c0_i32 : i32, i32
  }
  func.func @transform_1(%arg0: i32) -> (i32, i32) {
    %c0_i32 = arith.constant 0 : i32
    %c0_i32_0 = arith.constant 0 : i32
    return %arg0, %c0_i32 : i32, i32
  }
  func.func @transform_2(%arg0: i32) -> (i32, i32) {
    %c0_i32 = arith.constant 0 : i32
    %c0_i32_0 = arith.constant 0 : i32
    %c0_i32_1 = arith.constant 0 : i32
    return %c0_i32, %c0_i32_0 : i32, i32
  }
  func.func @transform_3(%arg0: i32) -> (i32, i32) {
    %c0_i32 = arith.constant 0 : i32
    %c0_i32_0 = arith.constant 0 : i32
    %c0_i32_1 = arith.constant 0 : i32
    return %c0_i32, %c0_i32_0 : i32, i32
  }
  func.func @transform_4(%arg0: i32) -> (i32, i32) {
    %c0_i32 = arith.constant 0 : i32
    %c0_i32_0 = arith.constant 0 : i32
    %c0_i32_1 = arith.constant 0 : i32
    return %c0_i32, %c0_i32_0 : i32, i32
  }
  func.func @transform_5(%arg0: i32) -> (i32, i32) {
    %c0_i32 = arith.constant 0 : i32
    %c0_i32_0 = arith.constant 0 : i32
    %c0_i32_1 = arith.constant 0 : i32
    return %c0_i32, %c0_i32_0 : i32, i32
  }
  func.func @transform_6(%arg0: i32) -> (i32, i32) {
    %c0_i32 = arith.constant 0 : i32
    %c0_i32_0 = arith.constant 0 : i32
    %c0_i32_1 = arith.constant 0 : i32
    return %c0_i32, %c0_i32_0 : i32, i32
  }
  func.func @transform_7(%arg0: i32) -> (i32, i32) {
    %c0_i32 = arith.constant 0 : i32
    %c0_i32_0 = arith.constant 0 : i32
    %c0_i32_1 = arith.constant 0 : i32
    return %c0_i32, %c0_i32_0 : i32, i32
  }
  func.func @transform_8(%arg0: i32) -> (i32, i32) {
    %c0_i32 = arith.constant 0 : i32
    %c0_i32_0 = arith.constant 0 : i32
    %c0_i32_1 = arith.constant 0 : i32
    return %c0_i32, %c0_i32_0 : i32, i32
  }
  func.func @transform_9(%arg0: i32) -> (i32, i32) {
    %c0_i32 = arith.constant 0 : i32
    %c0_i32_0 = arith.constant 0 : i32
    return %c0_i32, %arg0 : i32, i32
  }
}

</mosaic_0001>

<llo_original>
// kernel: tpu_custom_call.1
$region0: #{tpu_custom_call.1}
  #allocation0 [shape = 'u32[]', space=smem, size = 0x4, offset = 0x4, fixed_abs, tag = 'smem constant byte address 0x4 - core index']
  #allocation1 [shape = 'u32[144,128]{1,0:T(1,128)}', space=vmem, size = 0x12000, scoped, tag = 'internal scratch']
  #allocation2 [shape = 'f32[1,1]{1,0:T(1,128)S(1)}', space=vmem, size = 0x200, scoped, tag = 'scoped memory for tpu_custom_call.1']
  %s0 = inlined_call_operand.vmem [shape: f32[1024,16], index: 0, kind: input, shape index: {}]
  %s1 = inlined_call_operand.vmem [shape: s32[1024,1], index: 1, kind: input, shape index: {}]
  %s2 = inlined_call_operand.vmem [shape: f32[16,32], index: 2, kind: input, shape index: {}]
  %s3 = inlined_call_operand.vmem [shape: f32[8,32], index: 3, kind: input, shape index: {}]
  %s4 = inlined_call_operand.vmem [shape: f32[1,32], index: 4, kind: input, shape index: {}]
  %s5 = inlined_call_operand.vmem [shape: f32[32,32], index: 5, kind: input, shape index: {}]
  %s6 = inlined_call_operand.vmem [shape: f32[1,32], index: 6, kind: input, shape index: {}]
  %s7 = inlined_call_operand.vmem [shape: f32[1,32], index: 7, kind: input, shape index: {}]
  %s8 = inlined_call_operand.<no memory space> [shape: f32[1,1], index: 8, kind: input, shape index: {}]
  %s9 = inlined_call_operand.hbm [shape: f32[1,1024], index: 9, kind: output, shape index: {}]
  %s10 = sld [smem:[#allocation0]]
  $region69: #{tpu_custom_call.1} parent=0
    _
  %s12 = ssub.s32 1, %s10
  %s13 = scalar_select 0, %s12, %s10
  %v14 = vstv %s8
  %15 = vst [vmem:[#allocation2] sm:$0x1] %v14
  $region1: #{tpu_custom_call.1} parent=0
    #allocation3 [shape = 'u8[4096]{0}', space=vmem, size = 0x1000, scoped, tag = 'output window, operand 0']
    #allocation4 [shape = 's32[2]{0}', space=sflag, size = 0x8, scoped, tag = 'scoped memory for tpu_custom_call.1']
    %16 = vsyncpa [#allocation4], 0
    %s17 = scalar_lea.sflag [#allocation4], 1
    %18 = vsyncpa %s17, 0
    loop: start=0, step=1, limit=4
    $region2: #{tpu_custom_call.1} parent=1 // loop_pre_header
      _
    $region3: #{tpu_custom_call.1} parent=1 // loop_header
      %s20 = sphi 0, %s24
      %p21 = scmp.ge.s32.totalorder %s20, 4
      %s30 = sphi 0, %s32
      %s33 = sphi 0, %s30
      %s34 = sphi 0, %s33
      %s50 = sphi 0, %s34
      %s56 = sphi 0, %s58
      %s59 = sphi 0, %s56
      %s60 = sphi 0, %s59
      %s76 = sphi 0, %s60
      %s80 = sphi 0, %s80
      %s82 = sphi 0, %s80
      %s83 = sphi 0, %s82
      %s97 = sphi 0, %s83
      %s101 = sphi 0, %s101
      %s103 = sphi 0, %s101
      %s104 = sphi 0, %s103
      %s118 = sphi 0, %s104
      %s122 = sphi 0, %s122
      %s124 = sphi 0, %s122
      %s125 = sphi 0, %s124
      %s139 = sphi 0, %s125
      %s143 = sphi 0, %s143
      %s145 = sphi 0, %s143
      %s146 = sphi 0, %s145
      %s160 = sphi 0, %s146
      %s164 = sphi 0, %s164
      %s166 = sphi 0, %s164
      %s167 = sphi 0, %s166
      %s181 = sphi 0, %s167
      %s185 = sphi 0, %s185
      %s187 = sphi 0, %s185
      %s188 = sphi 0, %s187
      %s202 = sphi 0, %s188
      %s206 = sphi 0, %s206
      %s208 = sphi 0, %s206
      %s209 = sphi 0, %s208
      %s223 = sphi 0, %s209
      %s229 = sphi 0, %s231
      %s232 = sphi 0, %s229
      %s233 = sphi 0, %s232
      %s249 = sphi 0, %s233
    $region4: #{tpu_custom_call.1} parent=1 // loop_header_branch
      %23 = sbr.rel (%p21) target = $region8
    $region5: #{tpu_custom_call.1} parent=1 // loop_body
      %s25 = ssub.s32 %s20, 1
      %s26 = ssub.s32 %s20, 2
      %s27 = sadd.s32 %s20, 1
      %s28 = ssub.s32 %s20, %s27
      %p29 = scmp.eq.s32.totalorder %s28, 0
      %s31 = sadd.s32 %s30, 1
      %s32 = scalar_select %p29, %s30, %s31
      %p35 = pneg %p29
      %p36 = scmp.eq.s32.totalorder %s20, 1
      %p37 = por %p35, %p36
      %p38 = scmp.ne.s32.totalorder %s30, %s33
      %p39 = scmp.eq.s32.totalorder %s20, 0
      %p40 = por %p38, %p39
      %p41 = scmp.ne.s32.totalorder %s30, %s33
      %p42 = scmp.eq.s32.totalorder %s25, 1
      %p43 = por %p41, %p42
      %p44 = scmp.ne.s32.totalorder %s33, %s34
      %p45 = scmp.eq.s32.totalorder %s25, 0
      %p46 = por %p44, %p45
      %p47 = scmp.ne.s32.totalorder %s33, %s34
      %p48 = scmp.eq.s32.totalorder %s26, 1
      %p49 = por %p47, %p48
      %p51 = scmp.ne.s32.totalorder %s34, %s50
      %p52 = scmp.eq.s32.totalorder %s26, 0
      %p53 = por %p51, %p52
      %s54 = ssub.s32 %s20, %s27
      %p55 = scmp.eq.s32.totalorder %s54, 0
      %s57 = sadd.s32 %s56, 1
      %s58 = scalar_select %p55, %s56, %s57
      %p61 = pneg %p55
      %p62 = scmp.eq.s32.totalorder %s20, 1
      %p63 = por %p61, %p62
      %p64 = scmp.ne.s32.totalorder %s56, %s59
      %p65 = scmp.eq.s32.totalorder %s20, 0
      %p66 = por %p64, %p65
      %p67 = scmp.ne.s32.totalorder %s56, %s59
      %p68 = scmp.eq.s32.totalorder %s25, 1
      %p69 = por %p67, %p68
      %p70 = scmp.ne.s32.totalorder %s59, %s60
      %p71 = scmp.eq.s32.totalorder %s25, 0
      %p72 = por %p70, %p71
      %p73 = scmp.ne.s32.totalorder %s59, %s60
      %p74 = scmp.eq.s32.totalorder %s26, 1
      %p75 = por %p73, %p74
      %p77 = scmp.ne.s32.totalorder %s60, %s76
      %p78 = scmp.eq.s32.totalorder %s26, 0
      %p79 = por %p77, %p78
      %s81 = sadd.s32 %s80, 1
      %p84 = scmp.eq.s32.totalorder %s20, 1
      %p85 = scmp.ne.s32.totalorder %s80, %s82
      %p86 = scmp.eq.s32.totalorder %s20, 0
      %p87 = por %p85, %p86
      %p88 = scmp.ne.s32.totalorder %s80, %s82
      %p89 = scmp.eq.s32.totalorder %s25, 1
      %p90 = por %p88, %p89
      %p91 = scmp.ne.s32.totalorder %s82, %s83
      %p92 = scmp.eq.s32.totalorder %s25, 0
      %p93 = por %p91, %p92
      %p94 = scmp.ne.s32.totalorder %s82, %s83
      %p95 = scmp.eq.s32.totalorder %s26, 1
      %p96 = por %p94, %p95
      %p98 = scmp.ne.s32.totalorder %s83, %s97
      %p99 = scmp.eq.s32.totalorder %s26, 0
      %p100 = por %p98, %p99
      %s102 = sadd.s32 %s101, 1
      %p105 = scmp.eq.s32.totalorder %s20, 1
      %p106 = scmp.ne.s32.totalorder %s101, %s103
      %p107 = scmp.eq.s32.totalorder %s20, 0
      %p108 = por %p106, %p107
      %p109 = scmp.ne.s32.totalorder %s101, %s103
      %p110 = scmp.eq.s32.totalorder %s25, 1
      %p111 = por %p109, %p110
      %p112 = scmp.ne.s32.totalorder %s103, %s104
      %p113 = scmp.eq.s32.totalorder %s25, 0
      %p114 = por %p112, %p113
      %p115 = scmp.ne.s32.totalorder %s103, %s104
      %p116 = scmp.eq.s32.totalorder %s26, 1
      %p117 = por %p115, %p116
      %p119 = scmp.ne.s32.totalorder %s104, %s118
      %p120 = scmp.eq.s32.totalorder %s26, 0
      %p121 = por %p119, %p120
      %s123 = sadd.s32 %s122, 1
      %p126 = scmp.eq.s32.totalorder %s20, 1
      %p127 = scmp.ne.s32.totalorder %s122, %s124
      %p128 = scmp.eq.s32.totalorder %s20, 0
      %p129 = por %p127, %p128
      %p130 = scmp.ne.s32.totalorder %s122, %s124
      %p131 = scmp.eq.s32.totalorder %s25, 1
      %p132 = por %p130, %p131
      %p133 = scmp.ne.s32.totalorder %s124, %s125
      %p134 = scmp.eq.s32.totalorder %s25, 0
      %p135 = por %p133, %p134
      %p136 = scmp.ne.s32.totalorder %s124, %s125
      %p137 = scmp.eq.s32.totalorder %s26, 1
      %p138 = por %p136, %p137
      %p140 = scmp.ne.s32.totalorder %s125, %s139
      %p141 = scmp.eq.s32.totalorder %s26, 0
      %p142 = por %p140, %p141
      %s144 = sadd.s32 %s143, 1
      %p147 = scmp.eq.s32.totalorder %s20, 1
      %p148 = scmp.ne.s32.totalorder %s143, %s145
      %p149 = scmp.eq.s32.totalorder %s20, 0
      %p150 = por %p148, %p149
      %p151 = scmp.ne.s32.totalorder %s143, %s145
      %p152 = scmp.eq.s32.totalorder %s25, 1
      %p153 = por %p151, %p152
      %p154 = scmp.ne.s32.totalorder %s145, %s146
      %p155 = scmp.eq.s32.totalorder %s25, 0
      %p156 = por %p154, %p155
      %p157 = scmp.ne.s32.totalorder %s145, %s146
      %p158 = scmp.eq.s32.totalorder %s26, 1
      %p159 = por %p157, %p158
      %p161 = scmp.ne.s32.totalorder %s146, %s160
      %p162 = scmp.eq.s32.totalorder %s26, 0
      %p163 = por %p161, %p162
      %s165 = sadd.s32 %s164, 1
      %p168 = scmp.eq.s32.totalorder %s20, 1
      %p169 = scmp.ne.s32.totalorder %s164, %s166
      %p170 = scmp.eq.s32.totalorder %s20, 0
      %p171 = por %p169, %p170
      %p172 = scmp.ne.s32.totalorder %s164, %s166
      %p173 = scmp.eq.s32.totalorder %s25, 1
      %p174 = por %p172, %p173
      %p175 = scmp.ne.s32.totalorder %s166, %s167
      %p176 = scmp.eq.s32.totalorder %s25, 0
      %p177 = por %p175, %p176
      %p178 = scmp.ne.s32.totalorder %s166, %s167
      %p179 = scmp.eq.s32.totalorder %s26, 1
      %p180 = por %p178, %p179
      %p182 = scmp.ne.s32.totalorder %s167, %s181
      %p183 = scmp.eq.s32.totalorder %s26, 0
      %p184 = por %p182, %p183
      %s186 = sadd.s32 %s185, 1
      %p189 = scmp.eq.s32.totalorder %s20, 1
      %p190 = scmp.ne.s32.totalorder %s185, %s187
      %p191 = scmp.eq.s32.totalorder %s20, 0
      %p192 = por %p190, %p191
      %p193 = scmp.ne.s32.totalorder %s185, %s187
      %p194 = scmp.eq.s32.totalorder %s25, 1
      %p195 = por %p193, %p194
      %p196 = scmp.ne.s32.totalorder %s187, %s188
      %p197 = scmp.eq.s32.totalorder %s25, 0
      %p198 = por %p196, %p197
      %p199 = scmp.ne.s32.totalorder %s187, %s188
      %p200 = scmp.eq.s32.totalorder %s26, 1
      %p201 = por %p199, %p200
      %p203 = scmp.ne.s32.totalorder %s188, %s202
      %p204 = scmp.eq.s32.totalorder %s26, 0
      %p205 = por %p203, %p204
      %s207 = sadd.s32 %s206, 1
      %p210 = scmp.eq.s32.totalorder %s20, 1
      %p211 = scmp.ne.s32.totalorder %s206, %s208
      %p212 = scmp.eq.s32.totalorder %s20, 0
      %p213 = por %p211, %p212
      %p214 = scmp.ne.s32.totalorder %s206, %s208
      %p215 = scmp.eq.s32.totalorder %s25, 1
      %p216 = por %p214, %p215
      %p217 = scmp.ne.s32.totalorder %s208, %s209
      %p218 = scmp.eq.s32.totalorder %s25, 0
      %p219 = por %p217, %p218
      %p220 = scmp.ne.s32.totalorder %s208, %s209
      %p221 = scmp.eq.s32.totalorder %s26, 1
      %p222 = por %p220, %p221
      %p224 = scmp.ne.s32.totalorder %s209, %s223
      %p225 = scmp.eq.s32.totalorder %s26, 0
      %p226 = por %p224, %p225
      %s227 = ssub.s32 %s20, %s27
      %p228 = scmp.eq.s32.totalorder %s227, 0
      %s230 = sadd.s32 %s229, 1
      %s231 = scalar_select %p228, %s229, %s230
      %p234 = pneg %p228
      %p235 = scmp.eq.s32.totalorder %s20, 1
      %p236 = por %p234, %p235
      %p237 = scmp.ne.s32.totalorder %s229, %s232
      %p238 = scmp.eq.s32.totalorder %s20, 0
      %p239 = por %p237, %p238
      %p240 = scmp.ne.s32.totalorder %s229, %s232
      %p241 = scmp.eq.s32.totalorder %s25, 1
      %p242 = por %p240, %p241
      %p243 = scmp.ne.s32.totalorder %s232, %s233
      %p244 = scmp.eq.s32.totalorder %s25, 0
      %p245 = por %p243, %p244
      %p246 = scmp.ne.s32.totalorder %s232, %s233
      %p247 = scmp.eq.s32.totalorder %s26, 1
      %p248 = por %p246, %p247
      %p250 = scmp.ne.s32.totalorder %s233, %s249
      %p251 = scmp.eq.s32.totalorder %s26, 0
      %p252 = por %p250, %p251
      %p253 = scmp.le.s32.totalorder 1, %s20
      %p254 = scmp.lt.s32.totalorder %s20, 3
      %p255 = pnand %p253, %p254
      %p256 = pneg %p255
      // Predicated region
      $region9: #{tpu_custom_call.1} parent=5 // pred_check
        _
      $region10: #{tpu_custom_call.1} parent=5 // pred_check_branch
        %258 = sbr.rel (%p255) target = $region12
      $region11: #{tpu_custom_call.1} parent=5 // pred_region
        %s259 = ssub.s32 %s20, 1
        // Predicated region
        $region13: #{tpu_custom_call.1} parent=11 // pred_check
          %p260 = pneg %p93
        $region14: #{tpu_custom_call.1} parent=11 // pred_check_branch
          %262 = sbr.rel (%p260) target = $region16
        $region15: #{tpu_custom_call.1} parent=11 // pred_region
          _
        $region16: #{tpu_custom_call.1} parent=11 // pred_fallthru
          _
        // Predicated region
        $region17: #{tpu_custom_call.1} parent=11 // pred_check
          %p263 = pneg %p114
        $region18: #{tpu_custom_call.1} parent=11 // pred_check_branch
          %265 = sbr.rel (%p263) target = $region20
        $region19: #{tpu_custom_call.1} parent=11 // pred_region
          _
        $region20: #{tpu_custom_call.1} parent=11 // pred_fallthru
          _
        // Predicated region
        $region21: #{tpu_custom_call.1} parent=11 // pred_check
          %p266 = pneg %p135
        $region22: #{tpu_custom_call.1} parent=11 // pred_check_branch
          %268 = sbr.rel (%p266) target = $region24
        $region23: #{tpu_custom_call.1} parent=11 // pred_region
          _
        $region24: #{tpu_custom_call.1} parent=11 // pred_fallthru
          _
        // Predicated region
        $region25: #{tpu_custom_call.1} parent=11 // pred_check
          %p269 = pneg %p156
        $region26: #{tpu_custom_call.1} parent=11 // pred_check_branch
          %271 = sbr.rel (%p269) target = $region28
        $region27: #{tpu_custom_call.1} parent=11 // pred_region
          _
        $region28: #{tpu_custom_call.1} parent=11 // pred_fallthru
          _
        // Predicated region
        $region29: #{tpu_custom_call.1} parent=11 // pred_check
          %p272 = pneg %p177
        $region30: #{tpu_custom_call.1} parent=11 // pred_check_branch
          %274 = sbr.rel (%p272) target = $region32
        $region31: #{tpu_custom_call.1} parent=11 // pred_region
          _
        $region32: #{tpu_custom_call.1} parent=11 // pred_fallthru
          _
        // Predicated region
        $region33: #{tpu_custom_call.1} parent=11 // pred_check
          %p275 = pneg %p198
        $region34: #{tpu_custom_call.1} parent=11 // pred_check_branch
          %277 = sbr.rel (%p275) target = $region36
        $region35: #{tpu_custom_call.1} parent=11 // pred_region
          _
        $region36: #{tpu_custom_call.1} parent=11 // pred_fallthru
          _
        // Predicated region
        $region37: #{tpu_custom_call.1} parent=11 // pred_check
          %p278 = pneg %p219
        $region38: #{tpu_custom_call.1} parent=11 // pred_check_branch
          %280 = sbr.rel (%p278) target = $region40
        $region39: #{tpu_custom_call.1} parent=11 // pred_region
          _
        $region40: #{tpu_custom_call.1} parent=11 // pred_fallthru
          _
      $region12: #{tpu_custom_call.1} parent=5 // pred_fallthru
        _
      %p281 = scmp.lt.s32.totalorder %s20, 2
      // Predicated region
      $region41: #{tpu_custom_call.1} parent=5 // pred_check
        %p282 = pneg %p281
      $region42: #{tpu_custom_call.1} parent=5 // pred_check_branch
        %284 = sbr.rel (%p282) target = $region44
      $region43: #{tpu_custom_call.1} parent=5 // pred_region
        // Predicated region
        $region45: #{tpu_custom_call.1} parent=43 // pred_check
          %p285 = pneg %p40
        $region46: #{tpu_custom_call.1} parent=43 // pred_check_branch
          %287 = sbr.rel (%p285) target = $region48
        $region47: #{tpu_custom_call.1} parent=43 // pred_region
          %s288 = smul.u32 64, %s20
          %p289 = scmp.lt.s32.totalorder %s288, 127
          %s290 = scalar_select %p289, %s288, 127
          %s291 = smul.addr %s290, 8
          %s292 = scalar_lea.vmem %s0, %s291
          %s293 = smul.u32 64, %s20
        $region48: #{tpu_custom_call.1} parent=43 // pred_fallthru
          _
        // Predicated region
        $region49: #{tpu_custom_call.1} parent=43 // pred_check
          %p294 = pneg %p66
        $region50: #{tpu_custom_call.1} parent=43 // pred_check_branch
          %296 = sbr.rel (%p294) target = $region52
        $region51: #{tpu_custom_call.1} parent=43 // pred_region
          %s297 = smul.u32 64, %s20
          %p298 = scmp.lt.s32.totalorder %s297, 127
          %s299 = scalar_select %p298, %s297, 127
          %s300 = smul.addr %s299, 8
          %s301 = scalar_lea.vmem %s1, %s300
          %s302 = smul.u32 64, %s20
        $region52: #{tpu_custom_call.1} parent=43 // pred_fallthru
          _
      $region44: #{tpu_custom_call.1} parent=5 // pred_fallthru
        _
      %p303 = scmp.le.s32.totalorder 1, %s20
      %p304 = scmp.lt.s32.totalorder %s20, 3
      %p305 = pnand %p303, %p304
      %p306 = pneg %p305
      // Predicated region
      $region53: #{tpu_custom_call.1} parent=5 // pred_check
        _
      $region54: #{tpu_custom_call.1} parent=5 // pred_check_branch
        %308 = sbr.rel (%p305) target = $region56
      $region55: #{tpu_custom_call.1} parent=5 // pred_region
        %s309 = ssub.s32 %s20, 1
        %s310 = smul.u32 64, %s25
        %p311 = scmp.lt.s32.totalorder %s310, 127
        %s312 = scalar_select %p311, %s310, 127
        %s313 = smul.addr %s312, 8
        %s314 = scalar_lea.vmem %s0, %s313
        %p315 = pneg %p46
        %p316 = pneg %p43
        %s317 = smul.u32 64, %s25
        %p318 = scmp.lt.s32.totalorder %s317, 127
        %s319 = scalar_select %p318, %s317, 127
        %s320 = smul.addr %s319, 8
        %s321 = scalar_lea.vmem %s1, %s320
        %p322 = pneg %p72
        %p323 = pneg %p69
        %p324 = pneg %p93
        %p325 = pneg %p90
        %p326 = pneg %p114
        %p327 = pneg %p111
        %p328 = pneg %p135
        %p329 = pneg %p132
        %p330 = pneg %p156
        %p331 = pneg %p153
        %p332 = pneg %p177
        %p333 = pneg %p174
        %p334 = pneg %p198
        %p335 = pneg %p195
        %p336 = pneg %p219
        %p337 = pneg %p216
        %p338 = pneg %p245
        %p339 = pneg %p242
        %s340 = sand.u32 %s232, 1
        %s341 = scalar_lea.sflag [#allocation4], %s340
        %s342 = sand.u32 %s232, 1
        %s343 = smul.addr %s342, 4
        %s344 = scalar_lea.vmem [#allocation3], %s343
        %s345 = smul.u32 64, %s25
        %p346 = scmp.lt.s32.totalorder %s345, 127
        %s347 = scalar_select %p346, %s345, 127
        %s348 = smul.addr %s347, 8
        %s349 = scalar_lea.vmem %s0, %s348
        %s350 = smul.u32 64, %s25
        %s351 = smul.u32 64, %s25
        %p352 = scmp.lt.s32.totalorder %s351, 127
        %s353 = scalar_select %p352, %s351, 127
        %s354 = smul.addr %s353, 8
        %s355 = scalar_lea.vmem %s1, %s354
        %s356 = smul.u32 64, %s25
        %s357 = smul.u32 4, %s25
        %v358 = vld [vmem:[%s349] sm:$0xff]
        %v359 = vld [vmem:[%s349 + $0x8] sm:$0xff]
        %v360 = vld [vmem:[%s349 + $0x10] sm:$0xff]
        %v361 = vld [vmem:[%s349 + $0x18] sm:$0xff]
        %v362 = vld [vmem:[%s349 + $0x20] sm:$0xff]
        %v363 = vld [vmem:[%s349 + $0x28] sm:$0xff]
        %v364 = vld [vmem:[%s349 + $0x30] sm:$0xff]
        %v365 = vld [vmem:[%s349 + $0x38] sm:$0xff]
        %v366 = vld [vmem:[%s349 + $0x40] sm:$0xff]
        %v367 = vld [vmem:[%s349 + $0x48] sm:$0xff]
        %v368 = vld [vmem:[%s349 + $0x50] sm:$0xff]
        %v369 = vld [vmem:[%s349 + $0x58] sm:$0xff]
        %v370 = vld [vmem:[%s349 + $0x60] sm:$0xff]
        %v371 = vld [vmem:[%s349 + $0x68] sm:$0xff]
        %v372 = vld [vmem:[%s349 + $0x70] sm:$0xff]
        %v373 = vld [vmem:[%s349 + $0x78] sm:$0xff]
        %v374 = vld [vmem:[%s349 + $0x80] sm:$0xff]
        %v375 = vld [vmem:[%s349 + $0x88] sm:$0xff]
        %v376 = vld [vmem:[%s349 + $0x90] sm:$0xff]
        %v377 = vld [vmem:[%s349 + $0x98] sm:$0xff]
        %v378 = vld [vmem:[%s349 + $0xa0] sm:$0xff]
        %v379 = vld [vmem:[%s349 + $0xa8] sm:$0xff]
        %v380 = vld [vmem:[%s349 + $0xb0] sm:$0xff]
        %v381 = vld [vmem:[%s349 + $0xb8] sm:$0xff]
        %v382 = vld [vmem:[%s349 + $0xc0] sm:$0xff]
        %v383 = vld [vmem:[%s349 + $0xc8] sm:$0xff]
        %v384 = vld [vmem:[%s349 + $0xd0] sm:$0xff]
        %v385 = vld [vmem:[%s349 + $0xd8] sm:$0xff]
        %v386 = vld [vmem:[%s349 + $0xe0] sm:$0xff]
        %v387 = vld [vmem:[%s349 + $0xe8] sm:$0xff]
        %v388 = vld [vmem:[%s349 + $0xf0] sm:$0xff]
        %v389 = vld [vmem:[%s349 + $0xf8] sm:$0xff]
        %v390 = vld [vmem:[%s349 + $0x100] sm:$0xff]
        %v391 = vld [vmem:[%s349 + $0x108] sm:$0xff]
        %v392 = vld [vmem:[%s349 + $0x110] sm:$0xff]
        %v393 = vld [vmem:[%s349 + $0x118] sm:$0xff]
        %v394 = vld [vmem:[%s349 + $0x120] sm:$0xff]
        %v395 = vld [vmem:[%s349 + $0x128] sm:$0xff]
        %v396 = vld [vmem:[%s349 + $0x130] sm:$0xff]
        %v397 = vld [vmem:[%s349 + $0x138] sm:$0xff]
        %v398 = vld [vmem:[%s349 + $0x140] sm:$0xff]
        %v399 = vld [vmem:[%s349 + $0x148] sm:$0xff]
        %v400 = vld [vmem:[%s349 + $0x150] sm:$0xff]
        %v401 = vld [vmem:[%s349 + $0x158] sm:$0xff]
        %v402 = vld [vmem:[%s349 + $0x160] sm:$0xff]
        %v403 = vld [vmem:[%s349 + $0x168] sm:$0xff]
        %v404 = vld [vmem:[%s349 + $0x170] sm:$0xff]
        %v405 = vld [vmem:[%s349 + $0x178] sm:$0xff]
        %v406 = vld [vmem:[%s349 + $0x180] sm:$0xff]
        %v407 = vld [vmem:[%s349 + $0x188] sm:$0xff]
        %v408 = vld [vmem:[%s349 + $0x190] sm:$0xff]
        %v409 = vld [vmem:[%s349 + $0x198] sm:$0xff]
        %v410 = vld [vmem:[%s349 + $0x1a0] sm:$0xff]
        %v411 = vld [vmem:[%s349 + $0x1a8] sm:$0xff]
        %v412 = vld [vmem:[%s349 + $0x1b0] sm:$0xff]
        %v413 = vld [vmem:[%s349 + $0x1b8] sm:$0xff]
        %v414 = vld [vmem:[%s349 + $0x1c0] sm:$0xff]
        %v415 = vld [vmem:[%s349 + $0x1c8] sm:$0xff]
        %v416 = vld [vmem:[%s349 + $0x1d0] sm:$0xff]
        %v417 = vld [vmem:[%s349 + $0x1d8] sm:$0xff]
        %v418 = vld [vmem:[%s349 + $0x1e0] sm:$0xff]
        %v419 = vld [vmem:[%s349 + $0x1e8] sm:$0xff]
        %v420 = vld [vmem:[%s349 + $0x1f0] sm:$0xff]
        %v421 = vld [vmem:[%s349 + $0x1f8] sm:$0xff]
        %v422 = vld [vmem:[%s355] sm:$0xff]
        %v423 = vld [vmem:[%s355 + $0x8] sm:$0xff]
        %v424 = vld [vmem:[%s355 + $0x10] sm:$0xff]
        %v425 = vld [vmem:[%s355 + $0x18] sm:$0xff]
        %v426 = vld [vmem:[%s355 + $0x20] sm:$0xff]
        %v427 = vld [vmem:[%s355 + $0x28] sm:$0xff]
        %v428 = vld [vmem:[%s355 + $0x30] sm:$0xff]
        %v429 = vld [vmem:[%s355 + $0x38] sm:$0xff]
        %v430 = vld [vmem:[%s355 + $0x40] sm:$0xff]
        %v431 = vld [vmem:[%s355 + $0x48] sm:$0xff]
        %v432 = vld [vmem:[%s355 + $0x50] sm:$0xff]
        %v433 = vld [vmem:[%s355 + $0x58] sm:$0xff]
        %v434 = vld [vmem:[%s355 + $0x60] sm:$0xff]
        %v435 = vld [vmem:[%s355 + $0x68] sm:$0xff]
        %v436 = vld [vmem:[%s355 + $0x70] sm:$0xff]
        %v437 = vld [vmem:[%s355 + $0x78] sm:$0xff]
        %v438 = vld [vmem:[%s355 + $0x80] sm:$0xff]
        %v439 = vld [vmem:[%s355 + $0x88] sm:$0xff]
        %v440 = vld [vmem:[%s355 + $0x90] sm:$0xff]
        %v441 = vld [vmem:[%s355 + $0x98] sm:$0xff]
        %v442 = vld [vmem:[%s355 + $0xa0] sm:$0xff]
        %v443 = vld [vmem:[%s355 + $0xa8] sm:$0xff]
        %v444 = vld [vmem:[%s355 + $0xb0] sm:$0xff]
        %v445 = vld [vmem:[%s355 + $0xb8] sm:$0xff]
        %v446 = vld [vmem:[%s355 + $0xc0] sm:$0xff]
        %v447 = vld [vmem:[%s355 + $0xc8] sm:$0xff]
        %v448 = vld [vmem:[%s355 + $0xd0] sm:$0xff]
        %v449 = vld [vmem:[%s355 + $0xd8] sm:$0xff]
        %v450 = vld [vmem:[%s355 + $0xe0] sm:$0xff]
        %v451 = vld [vmem:[%s355 + $0xe8] sm:$0xff]
        %v452 = vld [vmem:[%s355 + $0xf0] sm:$0xff]
        %v453 = vld [vmem:[%s355 + $0xf8] sm:$0xff]
        %v454 = vld [vmem:[%s355 + $0x100] sm:$0xff]
        %v455 = vld [vmem:[%s355 + $0x108] sm:$0xff]
        %v456 = vld [vmem:[%s355 + $0x110] sm:$0xff]
        %v457 = vld [vmem:[%s355 + $0x118] sm:$0xff]
        %v458 = vld [vmem:[%s355 + $0x120] sm:$0xff]
        %v459 = vld [vmem:[%s355 + $0x128] sm:$0xff]
        %v460 = vld [vmem:[%s355 + $0x130] sm:$0xff]
        %v461 = vld [vmem:[%s355 + $0x138] sm:$0xff]
        %v462 = vld [vmem:[%s355 + $0x140] sm:$0xff]
        %v463 = vld [vmem:[%s355 + $0x148] sm:$0xff]
        %v464 = vld [vmem:[%s355 + $0x150] sm:$0xff]
        %v465 = vld [vmem:[%s355 + $0x158] sm:$0xff]
        %v466 = vld [vmem:[%s355 + $0x160] sm:$0xff]
        %v467 = vld [vmem:[%s355 + $0x168] sm:$0xff]
        %v468 = vld [vmem:[%s355 + $0x170] sm:$0xff]
        %v469 = vld [vmem:[%s355 + $0x178] sm:$0xff]
        %v470 = vld [vmem:[%s355 + $0x180] sm:$0xff]
        %v471 = vld [vmem:[%s355 + $0x188] sm:$0xff]
        %v472 = vld [vmem:[%s355 + $0x190] sm:$0xff]
        %v473 = vld [vmem:[%s355 + $0x198] sm:$0xff]
        %v474 = vld [vmem:[%s355 + $0x1a0] sm:$0xff]
        %v475 = vld [vmem:[%s355 + $0x1a8] sm:$0xff]
        %v476 = vld [vmem:[%s355 + $0x1b0] sm:$0xff]
        %v477 = vld [vmem:[%s355 + $0x1b8] sm:$0xff]
        %v478 = vld [vmem:[%s355 + $0x1c0] sm:$0xff]
        %v479 = vld [vmem:[%s355 + $0x1c8] sm:$0xff]
        %v480 = vld [vmem:[%s355 + $0x1d0] sm:$0xff]
        %v481 = vld [vmem:[%s355 + $0x1d8] sm:$0xff]
        %v482 = vld [vmem:[%s355 + $0x1e0] sm:$0xff]
        %v483 = vld [vmem:[%s355 + $0x1e8] sm:$0xff]
        %v484 = vld [vmem:[%s355 + $0x1f0] sm:$0xff]
        %v485 = vld [vmem:[%s355 + $0x1f8] sm:$0xff]
        %v486 = vlaneseq
        %v487 = vand.u32 %v486, 127
        %488 = vset.pattern.permute.xlu0 0
        %489 = vperm.xlu0 %488, %v422
        %v490 = vpop.permute.xlu0 %489
        %491 = vset.pattern.permute.xlu0 0
        %492 = vperm.xlu0 %491, %v423
        %v493 = vpop.permute.xlu0 %492
        %494 = vset.pattern.permute.xlu0 0
        %495 = vperm.xlu0 %494, %v424
        %v496 = vpop.permute.xlu0 %495
        %497 = vset.pattern.permute.xlu0 0
        %498 = vperm.xlu0 %497, %v425
        %v499 = vpop.permute.xlu0 %498
        %500 = vset.pattern.permute.xlu0 0
        %501 = vperm.xlu0 %500, %v426
        %v502 = vpop.permute.xlu0 %501
        %503 = vset.pattern.permute.xlu0 0
        %504 = vperm.xlu0 %503, %v427
        %v505 = vpop.permute.xlu0 %504
        %506 = vset.pattern.permute.xlu0 0
        %507 = vperm.xlu0 %506, %v428
        %v508 = vpop.permute.xlu0 %507
        %509 = vset.pattern.permute.xlu0 0
        %510 = vperm.xlu0 %509, %v429
        %v511 = vpop.permute.xlu0 %510
        %512 = vset.pattern.permute.xlu0 0
        %513 = vperm.xlu0 %512, %v430
        %v514 = vpop.permute.xlu0 %513
        %515 = vset.pattern.permute.xlu0 0
        %516 = vperm.xlu0 %515, %v431
        %v517 = vpop.permute.xlu0 %516
        %518 = vset.pattern.permute.xlu0 0
        %519 = vperm.xlu0 %518, %v432
        %v520 = vpop.permute.xlu0 %519
        %521 = vset.pattern.permute.xlu0 0
        %522 = vperm.xlu0 %521, %v433
        %v523 = vpop.permute.xlu0 %522
        %524 = vset.pattern.permute.xlu0 0
        %525 = vperm.xlu0 %524, %v434
        %v526 = vpop.permute.xlu0 %525
        %527 = vset.pattern.permute.xlu0 0
        %528 = vperm.xlu0 %527, %v435
        %v529 = vpop.permute.xlu0 %528
        %530 = vset.pattern.permute.xlu0 0
        %531 = vperm.xlu0 %530, %v436
        %v532 = vpop.permute.xlu0 %531
        %533 = vset.pattern.permute.xlu0 0
        %534 = vperm.xlu0 %533, %v437
        %v535 = vpop.permute.xlu0 %534
        %536 = vset.pattern.permute.xlu0 0
        %537 = vperm.xlu0 %536, %v438
        %v538 = vpop.permute.xlu0 %537
        %539 = vset.pattern.permute.xlu0 0
        %540 = vperm.xlu0 %539, %v439
        %v541 = vpop.permute.xlu0 %540
        %542 = vset.pattern.permute.xlu0 0
        %543 = vperm.xlu0 %542, %v440
        %v544 = vpop.permute.xlu0 %543
        %545 = vset.pattern.permute.xlu0 0
        %546 = vperm.xlu0 %545, %v441
        %v547 = vpop.permute.xlu0 %546
        %548 = vset.pattern.permute.xlu0 0
        %549 = vperm.xlu0 %548, %v442
        %v550 = vpop.permute.xlu0 %549
        %551 = vset.pattern.permute.xlu0 0
        %552 = vperm.xlu0 %551, %v443
        %v553 = vpop.permute.xlu0 %552
        %554 = vset.pattern.permute.xlu0 0
        %555 = vperm.xlu0 %554, %v444
        %v556 = vpop.permute.xlu0 %555
        %557 = vset.pattern.permute.xlu0 0
        %558 = vperm.xlu0 %557, %v445
        %v559 = vpop.permute.xlu0 %558
        %560 = vset.pattern.permute.xlu0 0
        %561 = vperm.xlu0 %560, %v446
        %v562 = vpop.permute.xlu0 %561
        %563 = vset.pattern.permute.xlu0 0
        %564 = vperm.xlu0 %563, %v447
        %v565 = vpop.permute.xlu0 %564
        %566 = vset.pattern.permute.xlu0 0
        %567 = vperm.xlu0 %566, %v448
        %v568 = vpop.permute.xlu0 %567
        %569 = vset.pattern.permute.xlu0 0
        %570 = vperm.xlu0 %569, %v449
        %v571 = vpop.permute.xlu0 %570
        %572 = vset.pattern.permute.xlu0 0
        %573 = vperm.xlu0 %572, %v450
        %v574 = vpop.permute.xlu0 %573
        %575 = vset.pattern.permute.xlu0 0
        %576 = vperm.xlu0 %575, %v451
        %v577 = vpop.permute.xlu0 %576
        %578 = vset.pattern.permute.xlu0 0
        %579 = vperm.xlu0 %578, %v452
        %v580 = vpop.permute.xlu0 %579
        %581 = vset.pattern.permute.xlu0 0
        %582 = vperm.xlu0 %581, %v453
        %v583 = vpop.permute.xlu0 %582
        %584 = vset.pattern.permute.xlu0 0
        %585 = vperm.xlu0 %584, %v454
        %v586 = vpop.permute.xlu0 %585
        %587 = vset.pattern.permute.xlu0 0
        %588 = vperm.xlu0 %587, %v455
        %v589 = vpop.permute.xlu0 %588
        %590 = vset.pattern.permute.xlu0 0
        %591 = vperm.xlu0 %590, %v456
        %v592 = vpop.permute.xlu0 %591
        %593 = vset.pattern.permute.xlu0 0
        %594 = vperm.xlu0 %593, %v457
        %v595 = vpop.permute.xlu0 %594
        %596 = vset.pattern.permute.xlu0 0
        %597 = vperm.xlu0 %596, %v458
        %v598 = vpop.permute.xlu0 %597
        %599 = vset.pattern.permute.xlu0 0
        %600 = vperm.xlu0 %599, %v459
        %v601 = vpop.permute.xlu0 %600
        %602 = vset.pattern.permute.xlu0 0
        %603 = vperm.xlu0 %602, %v460
        %v604 = vpop.permute.xlu0 %603
        %605 = vset.pattern.permute.xlu0 0
        %606 = vperm.xlu0 %605, %v461
        %v607 = vpop.permute.xlu0 %606
        %608 = vset.pattern.permute.xlu0 0
        %609 = vperm.xlu0 %608, %v462
        %v610 = vpop.permute.xlu0 %609
        %611 = vset.pattern.permute.xlu0 0
        %612 = vperm.xlu0 %611, %v463
        %v613 = vpop.permute.xlu0 %612
        %614 = vset.pattern.permute.xlu0 0
        %615 = vperm.xlu0 %614, %v464
        %v616 = vpop.permute.xlu0 %615
        %617 = vset.pattern.permute.xlu0 0
        %618 = vperm.xlu0 %617, %v465
        %v619 = vpop.permute.xlu0 %618
        %620 = vset.pattern.permute.xlu0 0
        %621 = vperm.xlu0 %620, %v466
        %v622 = vpop.permute.xlu0 %621
        %623 = vset.pattern.permute.xlu0 0
        %624 = vperm.xlu0 %623, %v467
        %v625 = vpop.permute.xlu0 %624
        %626 = vset.pattern.permute.xlu0 0
        %627 = vperm.xlu0 %626, %v468
        %v628 = vpop.permute.xlu0 %627
        %629 = vset.pattern.permute.xlu0 0
        %630 = vperm.xlu0 %629, %v469
        %v631 = vpop.permute.xlu0 %630
        %632 = vset.pattern.permute.xlu0 0
        %633 = vperm.xlu0 %632, %v470
        %v634 = vpop.permute.xlu0 %633
        %635 = vset.pattern.permute.xlu0 0
        %636 = vperm.xlu0 %635, %v471
        %v637 = vpop.permute.xlu0 %636
        %638 = vset.pattern.permute.xlu0 0
        %639 = vperm.xlu0 %638, %v472
        %v640 = vpop.permute.xlu0 %639
        %641 = vset.pattern.permute.xlu0 0
        %642 = vperm.xlu0 %641, %v473
        %v643 = vpop.permute.xlu0 %642
        %644 = vset.pattern.permute.xlu0 0
        %645 = vperm.xlu0 %644, %v474
        %v646 = vpop.permute.xlu0 %645
        %647 = vset.pattern.permute.xlu0 0
        %648 = vperm.xlu0 %647, %v475
        %v649 = vpop.permute.xlu0 %648
        %650 = vset.pattern.permute.xlu0 0
        %651 = vperm.xlu0 %650, %v476
        %v652 = vpop.permute.xlu0 %651
        %653 = vset.pattern.permute.xlu0 0
        %654 = vperm.xlu0 %653, %v477
        %v655 = vpop.permute.xlu0 %654
        %656 = vset.pattern.permute.xlu0 0
        %657 = vperm.xlu0 %656, %v478
        %v658 = vpop.permute.xlu0 %657
        %659 = vset.pattern.permute.xlu0 0
        %660 = vperm.xlu0 %659, %v479
        %v661 = vpop.permute.xlu0 %660
        %662 = vset.pattern.permute.xlu0 0
        %663 = vperm.xlu0 %662, %v480
        %v664 = vpop.permute.xlu0 %663
        %665 = vset.pattern.permute.xlu0 0
        %666 = vperm.xlu0 %665, %v481
        %v667 = vpop.permute.xlu0 %666
        %668 = vset.pattern.permute.xlu0 0
        %669 = vperm.xlu0 %668, %v482
        %v670 = vpop.permute.xlu0 %669
        %671 = vset.pattern.permute.xlu0 0
        %672 = vperm.xlu0 %671, %v483
        %v673 = vpop.permute.xlu0 %672
        %674 = vset.pattern.permute.xlu0 0
        %675 = vperm.xlu0 %674, %v484
        %v676 = vpop.permute.xlu0 %675
        %677 = vset.pattern.permute.xlu0 0
        %678 = vperm.xlu0 %677, %v485
        %v679 = vpop.permute.xlu0 %678
        %vm680 = vcmp.eq.s32.totalorder %v490, %v487
        %vm681 = vcmp.eq.s32.totalorder %v493, %v487
        %vm682 = vcmp.eq.s32.totalorder %v496, %v487
        %vm683 = vcmp.eq.s32.totalorder %v499, %v487
        %vm684 = vcmp.eq.s32.totalorder %v502, %v487
        %vm685 = vcmp.eq.s32.totalorder %v505, %v487
        %vm686 = vcmp.eq.s32.totalorder %v508, %v487
        %vm687 = vcmp.eq.s32.totalorder %v511, %v487
        %vm688 = vcmp.eq.s32.totalorder %v514, %v487
        %vm689 = vcmp.eq.s32.totalorder %v517, %v487
        %vm690 = vcmp.eq.s32.totalorder %v520, %v487
        %vm691 = vcmp.eq.s32.totalorder %v523, %v487
        %vm692 = vcmp.eq.s32.totalorder %v526, %v487
        %vm693 = vcmp.eq.s32.totalorder %v529, %v487
        %vm694 = vcmp.eq.s32.totalorder %v532, %v487
        %vm695 = vcmp.eq.s32.totalorder %v535, %v487
        %vm696 = vcmp.eq.s32.totalorder %v538, %v487
        %vm697 = vcmp.eq.s32.totalorder %v541, %v487
        %vm698 = vcmp.eq.s32.totalorder %v544, %v487
        %vm699 = vcmp.eq.s32.totalorder %v547, %v487
        %vm700 = vcmp.eq.s32.totalorder %v550, %v487
        %vm701 = vcmp.eq.s32.totalorder %v553, %v487
        %vm702 = vcmp.eq.s32.totalorder %v556, %v487
        %vm703 = vcmp.eq.s32.totalorder %v559, %v487
        %vm704 = vcmp.eq.s32.totalorder %v562, %v487
        %vm705 = vcmp.eq.s32.totalorder %v565, %v487
        %vm706 = vcmp.eq.s32.totalorder %v568, %v487
        %vm707 = vcmp.eq.s32.totalorder %v571, %v487
        %vm708 = vcmp.eq.s32.totalorder %v574, %v487
        %vm709 = vcmp.eq.s32.totalorder %v577, %v487
        %vm710 = vcmp.eq.s32.totalorder %v580, %v487
        %vm711 = vcmp.eq.s32.totalorder %v583, %v487
        %vm712 = vcmp.eq.s32.totalorder %v586, %v487
        %vm713 = vcmp.eq.s32.totalorder %v589, %v487
        %vm714 = vcmp.eq.s32.totalorder %v592, %v487
        %vm715 = vcmp.eq.s32.totalorder %v595, %v487
        %vm716 = vcmp.eq.s32.totalorder %v598, %v487
        %vm717 = vcmp.eq.s32.totalorder %v601, %v487
        %vm718 = vcmp.eq.s32.totalorder %v604, %v487
        %vm719 = vcmp.eq.s32.totalorder %v607, %v487
        %vm720 = vcmp.eq.s32.totalorder %v610, %v487
        %vm721 = vcmp.eq.s32.totalorder %v613, %v487
        %vm722 = vcmp.eq.s32.totalorder %v616, %v487
        %vm723 = vcmp.eq.s32.totalorder %v619, %v487
        %vm724 = vcmp.eq.s32.totalorder %v622, %v487
        %vm725 = vcmp.eq.s32.totalorder %v625, %v487
        %vm726 = vcmp.eq.s32.totalorder %v628, %v487
        %vm727 = vcmp.eq.s32.totalorder %v631, %v487
        %vm728 = vcmp.eq.s32.totalorder %v634, %v487
        %vm729 = vcmp.eq.s32.totalorder %v637, %v487
        %vm730 = vcmp.eq.s32.totalorder %v640, %v487
        %vm731 = vcmp.eq.s32.totalorder %v643, %v487
        %vm732 = vcmp.eq.s32.totalorder %v646, %v487
        %vm733 = vcmp.eq.s32.totalorder %v649, %v487
        %vm734 = vcmp.eq.s32.totalorder %v652, %v487
        %vm735 = vcmp.eq.s32.totalorder %v655, %v487
        %vm736 = vcmp.eq.s32.totalorder %v658, %v487
        %vm737 = vcmp.eq.s32.totalorder %v661, %v487
        %vm738 = vcmp.eq.s32.totalorder %v664, %v487
        %vm739 = vcmp.eq.s32.totalorder %v667, %v487
        %vm740 = vcmp.eq.s32.totalorder %v670, %v487
        %vm741 = vcmp.eq.s32.totalorder %v673, %v487
        %vm742 = vcmp.eq.s32.totalorder %v676, %v487
        %vm743 = vcmp.eq.s32.totalorder %v679, %v487
        %v744 = vsel %vm680, 1, 0
        %v745 = vsel %vm681, 1, 0
        %v746 = vsel %vm682, 1, 0
        %v747 = vsel %vm683, 1, 0
        %v748 = vsel %vm684, 1, 0
        %v749 = vsel %vm685, 1, 0
        %v750 = vsel %vm686, 1, 0
        %v751 = vsel %vm687, 1, 0
        %v752 = vsel %vm688, 1, 0
        %v753 = vsel %vm689, 1, 0
        %v754 = vsel %vm690, 1, 0
        %v755 = vsel %vm691, 1, 0
        %v756 = vsel %vm692, 1, 0
        %v757 = vsel %vm693, 1, 0
        %v758 = vsel %vm694, 1, 0
        %v759 = vsel %vm695, 1, 0
        %v760 = vsel %vm696, 1, 0
        %v761 = vsel %vm697, 1, 0
        %v762 = vsel %vm698, 1, 0
        %v763 = vsel %vm699, 1, 0
        %v764 = vsel %vm700, 1, 0
        %v765 = vsel %vm701, 1, 0
        %v766 = vsel %vm702, 1, 0
        %v767 = vsel %vm703, 1, 0
        %v768 = vsel %vm704, 1, 0
        %v769 = vsel %vm705, 1, 0
        %v770 = vsel %vm706, 1, 0
        %v771 = vsel %vm707, 1, 0
        %v772 = vsel %vm708, 1, 0
        %v773 = vsel %vm709, 1, 0
        %v774 = vsel %vm710, 1, 0
        %v775 = vsel %vm711, 1, 0
        %v776 = vsel %vm712, 1, 0
        %v777 = vsel %vm713, 1, 0
        %v778 = vsel %vm714, 1, 0
        %v779 = vsel %vm715, 1, 0
        %v780 = vsel %vm716, 1, 0
        %v781 = vsel %vm717, 1, 0
        %v782 = vsel %vm718, 1, 0
        %v783 = vsel %vm719, 1, 0
        %v784 = vsel %vm720, 1, 0
        %v785 = vsel %vm721, 1, 0
        %v786 = vsel %vm722, 1, 0
        %v787 = vsel %vm723, 1, 0
        %v788 = vsel %vm724, 1, 0
        %v789 = vsel %vm725, 1, 0
        %v790 = vsel %vm726, 1, 0
        %v791 = vsel %vm727, 1, 0
        %v792 = vsel %vm728, 1, 0
        %v793 = vsel %vm729, 1, 0
        %v794 = vsel %vm730, 1, 0
        %v795 = vsel %vm731, 1, 0
        %v796 = vsel %vm732, 1, 0
        %v797 = vsel %vm733, 1, 0
        %v798 = vsel %vm734, 1, 0
        %v799 = vsel %vm735, 1, 0
        %v800 = vsel %vm736, 1, 0
        %v801 = vsel %vm737, 1, 0
        %v802 = vsel %vm738, 1, 0
        %v803 = vsel %vm739, 1, 0
        %v804 = vsel %vm740, 1, 0
        %v805 = vsel %vm741, 1, 0
        %v806 = vsel %vm742, 1, 0
        %v807 = vsel %vm743, 1, 0
        %v808 = vcvt.s32.f32 %v744
        %v809 = vcvt.s32.f32 %v745
        %v810 = vcvt.s32.f32 %v746
        %v811 = vcvt.s32.f32 %v747
        %v812 = vcvt.s32.f32 %v748
        %v813 = vcvt.s32.f32 %v749
        %v814 = vcvt.s32.f32 %v750
        %v815 = vcvt.s32.f32 %v751
        %v816 = vcvt.s32.f32 %v752
        %v817 = vcvt.s32.f32 %v753
        %v818 = vcvt.s32.f32 %v754
        %v819 = vcvt.s32.f32 %v755
        %v820 = vcvt.s32.f32 %v756
        %v821 = vcvt.s32.f32 %v757
        %v822 = vcvt.s32.f32 %v758
        %v823 = vcvt.s32.f32 %v759
        %v824 = vcvt.s32.f32 %v760
        %v825 = vcvt.s32.f32 %v761
        %v826 = vcvt.s32.f32 %v762
        %v827 = vcvt.s32.f32 %v763
        %v828 = vcvt.s32.f32 %v764
        %v829 = vcvt.s32.f32 %v765
        %v830 = vcvt.s32.f32 %v766
        %v831 = vcvt.s32.f32 %v767
        %v832 = vcvt.s32.f32 %v768
        %v833 = vcvt.s32.f32 %v769
        %v834 = vcvt.s32.f32 %v770
        %v835 = vcvt.s32.f32 %v771
        %v836 = vcvt.s32.f32 %v772
        %v837 = vcvt.s32.f32 %v773
        %v838 = vcvt.s32.f32 %v774
        %v839 = vcvt.s32.f32 %v775
        %v840 = vcvt.s32.f32 %v776
        %v841 = vcvt.s32.f32 %v777
        %v842 = vcvt.s32.f32 %v778
        %v843 = vcvt.s32.f32 %v779
        %v844 = vcvt.s32.f32 %v780
        %v845 = vcvt.s32.f32 %v781
        %v846 = vcvt.s32.f32 %v782
        %v847 = vcvt.s32.f32 %v783
        %v848 = vcvt.s32.f32 %v784
        %v849 = vcvt.s32.f32 %v785
        %v850 = vcvt.s32.f32 %v786
        %v851 = vcvt.s32.f32 %v787
        %v852 = vcvt.s32.f32 %v788
        %v853 = vcvt.s32.f32 %v789
        %v854 = vcvt.s32.f32 %v790
        %v855 = vcvt.s32.f32 %v791
        %v856 = vcvt.s32.f32 %v792
        %v857 = vcvt.s32.f32 %v793
        %v858 = vcvt.s32.f32 %v794
        %v859 = vcvt.s32.f32 %v795
        %v860 = vcvt.s32.f32 %v796
        %v861 = vcvt.s32.f32 %v797
        %v862 = vcvt.s32.f32 %v798
        %v863 = vcvt.s32.f32 %v799
        %v864 = vcvt.s32.f32 %v800
        %v865 = vcvt.s32.f32 %v801
        %v866 = vcvt.s32.f32 %v802
        %v867 = vcvt.s32.f32 %v803
        %v868 = vcvt.s32.f32 %v804
        %v869 = vcvt.s32.f32 %v805
        %v870 = vcvt.s32.f32 %v806
        %v871 = vcvt.s32.f32 %v807
        %v872 = vld [vmem:[%s2] sm:$0xff]
        %v873 = vld [vmem:[%s2 + $0x8] sm:$0xff]
        %v874 = vld [vmem:[%s3] sm:$0xff]
        %vm875 = vcmask 64512
        %v877 = vsel %vm875, %v808, 0
        %v880 = vsel %vm875, %v809, 0
        %v883 = vsel %vm875, %v810, 0
        %v886 = vsel %vm875, %v811, 0
        %v889 = vsel %vm875, %v812, 0
        %v892 = vsel %vm875, %v813, 0
        %v895 = vsel %vm875, %v814, 0
        %v898 = vsel %vm875, %v815, 0
        %v901 = vsel %vm875, %v816, 0
        %v904 = vsel %vm875, %v817, 0
        %v907 = vsel %vm875, %v818, 0
        %v910 = vsel %vm875, %v819, 0
        %v913 = vsel %vm875, %v820, 0
        %v916 = vsel %vm875, %v821, 0
        %v919 = vsel %vm875, %v822, 0
        %v922 = vsel %vm875, %v823, 0
        %v925 = vsel %vm875, %v824, 0
        %v928 = vsel %vm875, %v825, 0
        %v931 = vsel %vm875, %v826, 0
        %v934 = vsel %vm875, %v827, 0
        %v937 = vsel %vm875, %v828, 0
        %v940 = vsel %vm875, %v829, 0
        %v943 = vsel %vm875, %v830, 0
        %v946 = vsel %vm875, %v831, 0
        %v949 = vsel %vm875, %v832, 0
        %v952 = vsel %vm875, %v833, 0
        %v955 = vsel %vm875, %v834, 0
        %v958 = vsel %vm875, %v835, 0
        %v961 = vsel %vm875, %v836, 0
        %v964 = vsel %vm875, %v837, 0
        %v967 = vsel %vm875, %v838, 0
        %v970 = vsel %vm875, %v839, 0
        %v973 = vsel %vm875, %v840, 0
        %v976 = vsel %vm875, %v841, 0
        %v979 = vsel %vm875, %v842, 0
        %v982 = vsel %vm875, %v843, 0
        %v985 = vsel %vm875, %v844, 0
        %v988 = vsel %vm875, %v845, 0
        %v991 = vsel %vm875, %v846, 0
        %v994 = vsel %vm875, %v847, 0
        %v997 = vsel %vm875, %v848, 0
        %v1000 = vsel %vm875, %v849, 0
        %v1003 = vsel %vm875, %v850, 0
        %v1006 = vsel %vm875, %v851, 0
        %v1009 = vsel %vm875, %v852, 0
        %v1012 = vsel %vm875, %v853, 0
        %v1015 = vsel %vm875, %v854, 0
        %v1018 = vsel %vm875, %v855, 0
        %v1021 = vsel %vm875, %v856, 0
        %v1024 = vsel %vm875, %v857, 0
        %v1027 = vsel %vm875, %v858, 0
        %v1030 = vsel %vm875, %v859, 0
        %v1033 = vsel %vm875, %v860, 0
        %v1036 = vsel %vm875, %v861, 0
        %v1039 = vsel %vm875, %v862, 0
        %v1042 = vsel %vm875, %v863, 0
        %v1045 = vsel %vm875, %v864, 0
        %v1048 = vsel %vm875, %v865, 0
        %v1051 = vsel %vm875, %v866, 0
        %v1054 = vsel %vm875, %v867, 0
        %v1057 = vsel %vm875, %v868, 0
        %v1060 = vsel %vm875, %v869, 0
        %v1063 = vsel %vm875, %v870, 0
        %v1066 = vsel %vm875, %v871, 0
        %1068 = vmatprep.subr.mxu0 0.0
        %1069 = vmatpush1.msra.mxu0 0.0
        %1070 = vmatprep.subr.mxu0 0.0
        %1071 = vmatpush1.msra.mxu0 0.0
        %1072 = vmatprep.subr.mxu0 0.0
        %1073 = vmatpush1.msra.mxu0 0.0
        %1074 = vmatprep.subr.mxu0 0.0
        %1075 = vmatpush1.msra.mxu0 0.0
        %1076 = vmatprep.subr.mxu0 0.0
        %1077 = vmatpush1.msra.mxu0 0.0
        %1078 = vmatprep.subr.mxu0 0.0
        %1079 = vmatpush1.msra.mxu0 0.0
        %1080 = vmatprep.subr.mxu0 0.0
        %1081 = vmatpush1.msra.mxu0 0.0
        %1082 = vmatprep.subr.mxu0 0.0
        %1083 = vmatpush1.msra.mxu0 0.0
        %1084 = vmatprep.subr.mxu0 0.0
        %1085 = vmatpush1.msra.mxu0 0.0
        %1086 = vmatprep.subr.mxu0 0.0
        %1087 = vmatpush1.msra.mxu0 0.0
        %1088 = vmatprep.subr.mxu0 0.0
        %1089 = vmatpush1.msra.mxu0 0.0
        %1090 = vmatprep.subr.mxu0 0.0
        %1091 = vmatpush1.msra.mxu0 0.0
        %1092 = vmatprep.subr.mxu0 0.0
        %1093 = vmatpush1.msra.mxu0 0.0
        %1094 = vmatprep.subr.mxu0 0.0
        %1095 = vmatpush1.msra.mxu0 0.0
        %1096 = vmatprep.subr.mxu0 0.0
        %1097 = vmatpush1.msra.mxu0 0.0
        %1098 = vmatprep.subr.mxu0 0.0
        %1099 = vmatpush1.msra.mxu0 %v874
        %1100 = vmatprep.subr.mxu0 0.0
        %1101 = vmatpush2.msra.mxu0 0.0
        %1102 = vmatprep.subr.mxu0 0.0
        %1103 = vmatpush2.msra.mxu0 0.0
        %1104 = vmatprep.subr.mxu0 0.0
        %1105 = vmatpush2.msra.mxu0 0.0
        %1106 = vmatprep.subr.mxu0 0.0
        %1107 = vmatpush2.msra.mxu0 0.0
        %1108 = vmatprep.subr.mxu0 0.0
        %1109 = vmatpush2.msra.mxu0 0.0
        %1110 = vmatprep.subr.mxu0 0.0
        %1111 = vmatpush2.msra.mxu0 0.0
        %1112 = vmatprep.subr.mxu0 0.0
        %1113 = vmatpush2.msra.mxu0 0.0
        %1114 = vmatprep.subr.mxu0 0.0
        %1115 = vmatpush2.msra.mxu0 0.0
        %1116 = vmatprep.subr.mxu0 0.0
        %1117 = vmatpush2.msra.mxu0 0.0
        %1118 = vmatprep.subr.mxu0 0.0
        %1119 = vmatpush2.msra.mxu0 0.0
        %1120 = vmatprep.subr.mxu0 0.0
        %1121 = vmatpush2.msra.mxu0 0.0
        %1122 = vmatprep.subr.mxu0 0.0
        %1123 = vmatpush2.msra.mxu0 0.0
        %1124 = vmatprep.subr.mxu0 0.0
        %1125 = vmatpush2.msra.mxu0 0.0
        %1126 = vmatprep.subr.mxu0 0.0
        %1127 = vmatpush2.msra.mxu0 0.0
        %1128 = vmatprep.subr.mxu0 0.0
        %1129 = vmatpush2.msra.mxu0 0.0
        %1130 = vmatprep.subr.mxu0 0.0
        %1131 = vmatpush2.msra.mxu0 0.0
        %1132 = vmatprep.mubr.f32.mxu0 0.0
        %1133 = vmatmul.mubr.f32.gmra.mxu0 %v877
        %v1134 = vpop.f32.mrf.mxu0
        %v1135 = vadd.f32 0.0, %v1134
        %v1136 = vpop.f32.mrf.mxu0
        %1137 = vmatprep.mubr.f32.mxu0 0.0
        %1138 = vmatmul.mubr.f32.gmra.mxu0 %v880
        %v1139 = vpop.f32.mrf.mxu0
        %v1140 = vadd.f32 0.0, %v1139
        %v1141 = vpop.f32.mrf.mxu0
        %1142 = vmatprep.mubr.f32.mxu0 0.0
        %1143 = vmatmul.mubr.f32.gmra.mxu0 %v883
        %v1144 = vpop.f32.mrf.mxu0
        %v1145 = vadd.f32 0.0, %v1144
        %v1146 = vpop.f32.mrf.mxu0
        %1147 = vmatprep.mubr.f32.mxu0 0.0
        %1148 = vmatmul.mubr.f32.gmra.mxu0 %v886
        %v1149 = vpop.f32.mrf.mxu0
        %v1150 = vadd.f32 0.0, %v1149
        %v1151 = vpop.f32.mrf.mxu0
        %1152 = vmatprep.mubr.f32.mxu0 0.0
        %1153 = vmatmul.mubr.f32.gmra.mxu0 %v889
        %v1154 = vpop.f32.mrf.mxu0
        %v1155 = vadd.f32 0.0, %v1154
        %v1156 = vpop.f32.mrf.mxu0
        %1157 = vmatprep.mubr.f32.mxu0 0.0
        %1158 = vmatmul.mubr.f32.gmra.mxu0 %v892
        %v1159 = vpop.f32.mrf.mxu0
        %v1160 = vadd.f32 0.0, %v1159
        %v1161 = vpop.f32.mrf.mxu0
        %1162 = vmatprep.mubr.f32.mxu0 0.0
        %1163 = vmatmul.mubr.f32.gmra.mxu0 %v895
        %v1164 = vpop.f32.mrf.mxu0
        %v1165 = vadd.f32 0.0, %v1164
        %v1166 = vpop.f32.mrf.mxu0
        %1167 = vmatprep.mubr.f32.mxu0 0.0
        %1168 = vmatmul.mubr.f32.gmra.mxu0 %v898
        %v1169 = vpop.f32.mrf.mxu0
        %v1170 = vadd.f32 0.0, %v1169
        %v1171 = vpop.f32.mrf.mxu0
        %1172 = vmatprep.mubr.f32.mxu0 0.0
        %1173 = vmatmul.mubr.f32.gmra.mxu0 %v901
        %v1174 = vpop.f32.mrf.mxu0
        %v1175 = vadd.f32 0.0, %v1174
        %v1176 = vpop.f32.mrf.mxu0
        %1177 = vmatprep.mubr.f32.mxu0 0.0
        %1178 = vmatmul.mubr.f32.gmra.mxu0 %v904
        %v1179 = vpop.f32.mrf.mxu0
        %v1180 = vadd.f32 0.0, %v1179
        %v1181 = vpop.f32.mrf.mxu0
        %1182 = vmatprep.mubr.f32.mxu0 0.0
        %1183 = vmatmul.mubr.f32.gmra.mxu0 %v907
        %v1184 = vpop.f32.mrf.mxu0
        %v1185 = vadd.f32 0.0, %v1184
        %v1186 = vpop.f32.mrf.mxu0
        %1187 = vmatprep.mubr.f32.mxu0 0.0
        %1188 = vmatmul.mubr.f32.gmra.mxu0 %v910
        %v1189 = vpop.f32.mrf.mxu0
        %v1190 = vadd.f32 0.0, %v1189
        %v1191 = vpop.f32.mrf.mxu0
        %1192 = vmatprep.mubr.f32.mxu0 0.0
        %1193 = vmatmul.mubr.f32.gmra.mxu0 %v913
        %v1194 = vpop.f32.mrf.mxu0
        %v1195 = vadd.f32 0.0, %v1194
        %v1196 = vpop.f32.mrf.mxu0
        %1197 = vmatprep.mubr.f32.mxu0 0.0
        %1198 = vmatmul.mubr.f32.gmra.mxu0 %v916
        %v1199 = vpop.f32.mrf.mxu0
        %v1200 = vadd.f32 0.0, %v1199
        %v1201 = vpop.f32.mrf.mxu0
        %1202 = vmatprep.mubr.f32.mxu0 0.0
        %1203 = vmatmul.mubr.f32.gmra.mxu0 %v919
        %v1204 = vpop.f32.mrf.mxu0
        %v1205 = vadd.f32 0.0, %v1204
        %v1206 = vpop.f32.mrf.mxu0
        %1207 = vmatprep.mubr.f32.mxu0 0.0
        %1208 = vmatmul.mubr.f32.gmra.mxu0 %v922
        %v1209 = vpop.f32.mrf.mxu0
        %v1210 = vadd.f32 0.0, %v1209
        %v1211 = vpop.f32.mrf.mxu0
        %1212 = vmatprep.mubr.f32.mxu0 0.0
        %1213 = vmatmul.mubr.f32.gmra.mxu0 %v925
        %v1214 = vpop.f32.mrf.mxu0
        %v1215 = vadd.f32 0.0, %v1214
        %v1216 = vpop.f32.mrf.mxu0
        %1217 = vmatprep.mubr.f32.mxu0 0.0
        %1218 = vmatmul.mubr.f32.gmra.mxu0 %v928
        %v1219 = vpop.f32.mrf.mxu0
        %v1220 = vadd.f32 0.0, %v1219
        %v1221 = vpop.f32.mrf.mxu0
        %1222 = vmatprep.mubr.f32.mxu0 0.0
        %1223 = vmatmul.mubr.f32.gmra.mxu0 %v931
        %v1224 = vpop.f32.mrf.mxu0
        %v1225 = vadd.f32 0.0, %v1224
        %v1226 = vpop.f32.mrf.mxu0
        %1227 = vmatprep.mubr.f32.mxu0 0.0
        %1228 = vmatmul.mubr.f32.gmra.mxu0 %v934
        %v1229 = vpop.f32.mrf.mxu0
        %v1230 = vadd.f32 0.0, %v1229
        %v1231 = vpop.f32.mrf.mxu0
        %1232 = vmatprep.mubr.f32.mxu0 0.0
        %1233 = vmatmul.mubr.f32.gmra.mxu0 %v937
        %v1234 = vpop.f32.mrf.mxu0
        %v1235 = vadd.f32 0.0, %v1234
        %v1236 = vpop.f32.mrf.mxu0
        %1237 = vmatprep.mubr.f32.mxu0 0.0
        %1238 = vmatmul.mubr.f32.gmra.mxu0 %v940
        %v1239 = vpop.f32.mrf.mxu0
        %v1240 = vadd.f32 0.0, %v1239
        %v1241 = vpop.f32.mrf.mxu0
        %1242 = vmatprep.mubr.f32.mxu0 0.0
        %1243 = vmatmul.mubr.f32.gmra.mxu0 %v943
        %v1244 = vpop.f32.mrf.mxu0
        %v1245 = vadd.f32 0.0, %v1244
        %v1246 = vpop.f32.mrf.mxu0
        %1247 = vmatprep.mubr.f32.mxu0 0.0
        %1248 = vmatmul.mubr.f32.gmra.mxu0 %v946
        %v1249 = vpop.f32.mrf.mxu0
        %v1250 = vadd.f32 0.0, %v1249
        %v1251 = vpop.f32.mrf.mxu0
        %1252 = vmatprep.mubr.f32.mxu0 0.0
        %1253 = vmatmul.mubr.f32.gmra.mxu0 %v949
        %v1254 = vpop.f32.mrf.mxu0
        %v1255 = vadd.f32 0.0, %v1254
        %v1256 = vpop.f32.mrf.mxu0
        %1257 = vmatprep.mubr.f32.mxu0 0.0
        %1258 = vmatmul.mubr.f32.gmra.mxu0 %v952
        %v1259 = vpop.f32.mrf.mxu0
        %v1260 = vadd.f32 0.0, %v1259
        %v1261 = vpop.f32.mrf.mxu0
        %1262 = vmatprep.mubr.f32.mxu0 0.0
        %1263 = vmatmul.mubr.f32.gmra.mxu0 %v955
        %v1264 = vpop.f32.mrf.mxu0
        %v1265 = vadd.f32 0.0, %v1264
        %v1266 = vpop.f32.mrf.mxu0
        %1267 = vmatprep.mubr.f32.mxu0 0.0
        %1268 = vmatmul.mubr.f32.gmra.mxu0 %v958
        %v1269 = vpop.f32.mrf.mxu0
        %v1270 = vadd.f32 0.0, %v1269
        %v1271 = vpop.f32.mrf.mxu0
        %1272 = vmatprep.mubr.f32.mxu0 0.0
        %1273 = vmatmul.mubr.f32.gmra.mxu0 %v961
        %v1274 = vpop.f32.mrf.mxu0
        %v1275 = vadd.f32 0.0, %v1274
        %v1276 = vpop.f32.mrf.mxu0
        %1277 = vmatprep.mubr.f32.mxu0 0.0
        %1278 = vmatmul.mubr.f32.gmra.mxu0 %v964
        %v1279 = vpop.f32.mrf.mxu0
        %v1280 = vadd.f32 0.0, %v1279
        %v1281 = vpop.f32.mrf.mxu0
        %1282 = vmatprep.mubr.f32.mxu0 0.0
        %1283 = vmatmul.mubr.f32.gmra.mxu0 %v967
        %v1284 = vpop.f32.mrf.mxu0
        %v1285 = vadd.f32 0.0, %v1284
        %v1286 = vpop.f32.mrf.mxu0
        %1287 = vmatprep.mubr.f32.mxu0 0.0
        %1288 = vmatmul.mubr.f32.gmra.mxu0 %v970
        %v1289 = vpop.f32.mrf.mxu0
        %v1290 = vadd.f32 0.0, %v1289
        %v1291 = vpop.f32.mrf.mxu0
        %1292 = vmatprep.mubr.f32.mxu0 0.0
        %1293 = vmatmul.mubr.f32.gmra.mxu0 %v973
        %v1294 = vpop.f32.mrf.mxu0
        %v1295 = vadd.f32 0.0, %v1294
        %v1296 = vpop.f32.mrf.mxu0
        %1297 = vmatprep.mubr.f32.mxu0 0.0
        %1298 = vmatmul.mubr.f32.gmra.mxu0 %v976
        %v1299 = vpop.f32.mrf.mxu0
        %v1300 = vadd.f32 0.0, %v1299
        %v1301 = vpop.f32.mrf.mxu0
        %1302 = vmatprep.mubr.f32.mxu0 0.0
        %1303 = vmatmul.mubr.f32.gmra.mxu0 %v979
        %v1304 = vpop.f32.mrf.mxu0
        %v1305 = vadd.f32 0.0, %v1304
        %v1306 = vpop.f32.mrf.mxu0
        %1307 = vmatprep.mubr.f32.mxu0 0.0
        %1308 = vmatmul.mubr.f32.gmra.mxu0 %v982
        %v1309 = vpop.f32.mrf.mxu0
        %v1310 = vadd.f32 0.0, %v1309
        %v1311 = vpop.f32.mrf.mxu0
        %1312 = vmatprep.mubr.f32.mxu0 0.0
        %1313 = vmatmul.mubr.f32.gmra.mxu0 %v985
        %v1314 = vpop.f32.mrf.mxu0
        %v1315 = vadd.f32 0.0, %v1314
        %v1316 = vpop.f32.mrf.mxu0
        %1317 = vmatprep.mubr.f32.mxu0 0.0
        %1318 = vmatmul.mubr.f32.gmra.mxu0 %v988
        %v1319 = vpop.f32.mrf.mxu0
        %v1320 = vadd.f32 0.0, %v1319
        %v1321 = vpop.f32.mrf.mxu0
        %1322 = vmatprep.mubr.f32.mxu0 0.0
        %1323 = vmatmul.mubr.f32.gmra.mxu0 %v991
        %v1324 = vpop.f32.mrf.mxu0
        %v1325 = vadd.f32 0.0, %v1324
        %v1326 = vpop.f32.mrf.mxu0
        %1327 = vmatprep.mubr.f32.mxu0 0.0
        %1328 = vmatmul.mubr.f32.gmra.mxu0 %v994
        %v1329 = vpop.f32.mrf.mxu0
        %v1330 = vadd.f32 0.0, %v1329
        %v1331 = vpop.f32.mrf.mxu0
        %1332 = vmatprep.mubr.f32.mxu0 0.0
        %1333 = vmatmul.mubr.f32.gmra.mxu0 %v997
        %v1334 = vpop.f32.mrf.mxu0
        %v1335 = vadd.f32 0.0, %v1334
        %v1336 = vpop.f32.mrf.mxu0
        %1337 = vmatprep.mubr.f32.mxu0 0.0
        %1338 = vmatmul.mubr.f32.gmra.mxu0 %v1000
        %v1339 = vpop.f32.mrf.mxu0
        %v1340 = vadd.f32 0.0, %v1339
        %v1341 = vpop.f32.mrf.mxu0
        %1342 = vmatprep.mubr.f32.mxu0 0.0
        %1343 = vmatmul.mubr.f32.gmra.mxu0 %v1003
        %v1344 = vpop.f32.mrf.mxu0
        %v1345 = vadd.f32 0.0, %v1344
        %v1346 = vpop.f32.mrf.mxu0
        %1347 = vmatprep.mubr.f32.mxu0 0.0
        %1348 = vmatmul.mubr.f32.gmra.mxu0 %v1006
        %v1349 = vpop.f32.mrf.mxu0
        %v1350 = vadd.f32 0.0, %v1349
        %v1351 = vpop.f32.mrf.mxu0
        %1352 = vmatprep.mubr.f32.mxu0 0.0
        %1353 = vmatmul.mubr.f32.gmra.mxu0 %v1009
        %v1354 = vpop.f32.mrf.mxu0
        %v1355 = vadd.f32 0.0, %v1354
        %v1356 = vpop.f32.mrf.mxu0
        %1357 = vmatprep.mubr.f32.mxu0 0.0
        %1358 = vmatmul.mubr.f32.gmra.mxu0 %v1012
        %v1359 = vpop.f32.mrf.mxu0
        %v1360 = vadd.f32 0.0, %v1359
        %v1361 = vpop.f32.mrf.mxu0
        %1362 = vmatprep.mubr.f32.mxu0 0.0
        %1363 = vmatmul.mubr.f32.gmra.mxu0 %v1015
        %v1364 = vpop.f32.mrf.mxu0
        %v1365 = vadd.f32 0.0, %v1364
        %v1366 = vpop.f32.mrf.mxu0
        %1367 = vmatprep.mubr.f32.mxu0 0.0
        %1368 = vmatmul.mubr.f32.gmra.mxu0 %v1018
        %v1369 = vpop.f32.mrf.mxu0
        %v1370 = vadd.f32 0.0, %v1369
        %v1371 = vpop.f32.mrf.mxu0
        %1372 = vmatprep.mubr.f32.mxu0 0.0
        %1373 = vmatmul.mubr.f32.gmra.mxu0 %v1021
        %v1374 = vpop.f32.mrf.mxu0
        %v1375 = vadd.f32 0.0, %v1374
        %v1376 = vpop.f32.mrf.mxu0
        %1377 = vmatprep.mubr.f32.mxu0 0.0
        %1378 = vmatmul.mubr.f32.gmra.mxu0 %v1024
        %v1379 = vpop.f32.mrf.mxu0
        %v1380 = vadd.f32 0.0, %v1379
        %v1381 = vpop.f32.mrf.mxu0
        %1382 = vmatprep.mubr.f32.mxu0 0.0
        %1383 = vmatmul.mubr.f32.gmra.mxu0 %v1027
        %v1384 = vpop.f32.mrf.mxu0
        %v1385 = vadd.f32 0.0, %v1384
        %v1386 = vpop.f32.mrf.mxu0
        %1387 = vmatprep.mubr.f32.mxu0 0.0
        %1388 = vmatmul.mubr.f32.gmra.mxu0 %v1030
        %v1389 = vpop.f32.mrf.mxu0
        %v1390 = vadd.f32 0.0, %v1389
        %v1391 = vpop.f32.mrf.mxu0
        %1392 = vmatprep.mubr.f32.mxu0 0.0
        %1393 = vmatmul.mubr.f32.gmra.mxu0 %v1033
        %v1394 = vpop.f32.mrf.mxu0
        %v1395 = vadd.f32 0.0, %v1394
        %v1396 = vpop.f32.mrf.mxu0
        %1397 = vmatprep.mubr.f32.mxu0 0.0
        %1398 = vmatmul.mubr.f32.gmra.mxu0 %v1036
        %v1399 = vpop.f32.mrf.mxu0
        %v1400 = vadd.f32 0.0, %v1399
        %v1401 = vpop.f32.mrf.mxu0
        %1402 = vmatprep.mubr.f32.mxu0 0.0
        %1403 = vmatmul.mubr.f32.gmra.mxu0 %v1039
        %v1404 = vpop.f32.mrf.mxu0
        %v1405 = vadd.f32 0.0, %v1404
        %v1406 = vpop.f32.mrf.mxu0
        %1407 = vmatprep.mubr.f32.mxu0 0.0
        %1408 = vmatmul.mubr.f32.gmra.mxu0 %v1042
        %v1409 = vpop.f32.mrf.mxu0
        %v1410 = vadd.f32 0.0, %v1409
        %v1411 = vpop.f32.mrf.mxu0
        %1412 = vmatprep.mubr.f32.mxu0 0.0
        %1413 = vmatmul.mubr.f32.gmra.mxu0 %v1045
        %v1414 = vpop.f32.mrf.mxu0
        %v1415 = vadd.f32 0.0, %v1414
        %v1416 = vpop.f32.mrf.mxu0
        %1417 = vmatprep.mubr.f32.mxu0 0.0
        %1418 = vmatmul.mubr.f32.gmra.mxu0 %v1048
        %v1419 = vpop.f32.mrf.mxu0
        %v1420 = vadd.f32 0.0, %v1419
        %v1421 = vpop.f32.mrf.mxu0
        %1422 = vmatprep.mubr.f32.mxu0 0.0
        %1423 = vmatmul.mubr.f32.gmra.mxu0 %v1051
        %v1424 = vpop.f32.mrf.mxu0
        %v1425 = vadd.f32 0.0, %v1424
        %v1426 = vpop.f32.mrf.mxu0
        %1427 = vmatprep.mubr.f32.mxu0 0.0
        %1428 = vmatmul.mubr.f32.gmra.mxu0 %v1054
        %v1429 = vpop.f32.mrf.mxu0
        %v1430 = vadd.f32 0.0, %v1429
        %v1431 = vpop.f32.mrf.mxu0
        %1432 = vmatprep.mubr.f32.mxu0 0.0
        %1433 = vmatmul.mubr.f32.gmra.mxu0 %v1057
        %v1434 = vpop.f32.mrf.mxu0
        %v1435 = vadd.f32 0.0, %v1434
        %v1436 = vpop.f32.mrf.mxu0
        %1437 = vmatprep.mubr.f32.mxu0 0.0
        %1438 = vmatmul.mubr.f32.gmra.mxu0 %v1060
        %v1439 = vpop.f32.mrf.mxu0
        %v1440 = vadd.f32 0.0, %v1439
        %v1441 = vpop.f32.mrf.mxu0
        %1442 = vmatprep.mubr.f32.mxu0 0.0
        %1443 = vmatmul.mubr.f32.gmra.mxu0 %v1063
        %v1444 = vpop.f32.mrf.mxu0
        %v1445 = vadd.f32 0.0, %v1444
        %v1446 = vpop.f32.mrf.mxu0
        %1447 = vmatprep.mubr.f32.mxu0 0.0
        %1448 = vmatmul.mubr.f32.gmra.mxu0 %v1066
        %v1449 = vpop.f32.mrf.mxu0
        %v1450 = vadd.f32 0.0, %v1449
        %v1451 = vpop.f32.mrf.mxu0
        %1452 = vdwg.mxu0
        %vm1453 = vcmask 130048
        %v1455 = vsel %vm1453, %v358, 0
        %v1458 = vsel %vm1453, %v359, 0
        %v1461 = vsel %vm1453, %v360, 0
        %v1464 = vsel %vm1453, %v361, 0
        %v1467 = vsel %vm1453, %v362, 0
        %v1470 = vsel %vm1453, %v363, 0
        %v1473 = vsel %vm1453, %v364, 0
        %v1476 = vsel %vm1453, %v365, 0
        %v1479 = vsel %vm1453, %v366, 0
        %v1482 = vsel %vm1453, %v367, 0
        %v1485 = vsel %vm1453, %v368, 0
        %v1488 = vsel %vm1453, %v369, 0
        %v1491 = vsel %vm1453, %v370, 0
        %v1494 = vsel %vm1453, %v371, 0
        %v1497 = vsel %vm1453, %v372, 0
        %v1500 = vsel %vm1453, %v373, 0
        %v1503 = vsel %vm1453, %v374, 0
        %v1506 = vsel %vm1453, %v375, 0
        %v1509 = vsel %vm1453, %v376, 0
        %v1512 = vsel %vm1453, %v377, 0
        %v1515 = vsel %vm1453, %v378, 0
        %v1518 = vsel %vm1453, %v379, 0
        %v1521 = vsel %vm1453, %v380, 0
        %v1524 = vsel %vm1453, %v381, 0
        %v1527 = vsel %vm1453, %v382, 0
        %v1530 = vsel %vm1453, %v383, 0
        %v1533 = vsel %vm1453, %v384, 0
        %v1536 = vsel %vm1453, %v385, 0
        %v1539 = vsel %vm1453, %v386, 0
        %v1542 = vsel %vm1453, %v387, 0
        %v1545 = vsel %vm1453, %v388, 0
        %v1548 = vsel %vm1453, %v389, 0
        %v1551 = vsel %vm1453, %v390, 0
        %v1554 = vsel %vm1453, %v391, 0
        %v1557 = vsel %vm1453, %v392, 0
        %v1560 = vsel %vm1453, %v393, 0
        %v1563 = vsel %vm1453, %v394, 0
        %v1566 = vsel %vm1453, %v395, 0
        %v1569 = vsel %vm1453, %v396, 0
        %v1572 = vsel %vm1453, %v397, 0
        %v1575 = vsel %vm1453, %v398, 0
        %v1578 = vsel %vm1453, %v399, 0
        %v1581 = vsel %vm1453, %v400, 0
        %v1584 = vsel %vm1453, %v401, 0
        %v1587 = vsel %vm1453, %v402, 0
        %v1590 = vsel %vm1453, %v403, 0
        %v1593 = vsel %vm1453, %v404, 0
        %v1596 = vsel %vm1453, %v405, 0
        %v1599 = vsel %vm1453, %v406, 0
        %v1602 = vsel %vm1453, %v407, 0
        %v1605 = vsel %vm1453, %v408, 0
        %v1608 = vsel %vm1453, %v409, 0
        %v1611 = vsel %vm1453, %v410, 0
        %v1614 = vsel %vm1453, %v411, 0
        %v1617 = vsel %vm1453, %v412, 0
        %v1620 = vsel %vm1453, %v413, 0
        %v1623 = vsel %vm1453, %v414, 0
        %v1626 = vsel %vm1453, %v415, 0
        %v1629 = vsel %vm1453, %v416, 0
        %v1632 = vsel %vm1453, %v417, 0
        %v1635 = vsel %vm1453, %v418, 0
        %v1638 = vsel %vm1453, %v419, 0
        %v1641 = vsel %vm1453, %v420, 0
        %v1644 = vsel %vm1453, %v421, 0
        %1646 = vmatprep.subr.mxu0 0.0
        %1647 = vmatpush1.msra.mxu0 0.0
        %1648 = vmatprep.subr.mxu0 0.0
        %1649 = vmatpush1.msra.mxu0 0.0
        %1650 = vmatprep.subr.mxu0 0.0
        %1651 = vmatpush1.msra.mxu0 0.0
        %1652 = vmatprep.subr.mxu0 0.0
        %1653 = vmatpush1.msra.mxu0 0.0
        %1654 = vmatprep.subr.mxu0 0.0
        %1655 = vmatpush1.msra.mxu0 0.0
        %1656 = vmatprep.subr.mxu0 0.0
        %1657 = vmatpush1.msra.mxu0 0.0
        %1658 = vmatprep.subr.mxu0 0.0
        %1659 = vmatpush1.msra.mxu0 0.0
        %1660 = vmatprep.subr.mxu0 0.0
        %1661 = vmatpush1.msra.mxu0 0.0
        %1662 = vmatprep.subr.mxu0 0.0
        %1663 = vmatpush1.msra.mxu0 0.0
        %1664 = vmatprep.subr.mxu0 0.0
        %1665 = vmatpush1.msra.mxu0 0.0
        %1666 = vmatprep.subr.mxu0 0.0
        %1667 = vmatpush1.msra.mxu0 0.0
        %1668 = vmatprep.subr.mxu0 0.0
        %1669 = vmatpush1.msra.mxu0 0.0
        %1670 = vmatprep.subr.mxu0 0.0
        %1671 = vmatpush1.msra.mxu0 0.0
        %1672 = vmatprep.subr.mxu0 0.0
        %1673 = vmatpush1.msra.mxu0 0.0
        %1674 = vmatprep.subr.mxu0 0.0
        %1675 = vmatpush1.msra.mxu0 %v873
        %1676 = vmatprep.subr.mxu0 0.0
        %1677 = vmatpush1.msra.mxu0 %v872
        %1678 = vmatprep.subr.mxu0 0.0
        %1679 = vmatpush2.msra.mxu0 0.0
        %1680 = vmatprep.subr.mxu0 0.0
        %1681 = vmatpush2.msra.mxu0 0.0
        %1682 = vmatprep.subr.mxu0 0.0
        %1683 = vmatpush2.msra.mxu0 0.0
        %1684 = vmatprep.subr.mxu0 0.0
        %1685 = vmatpush2.msra.mxu0 0.0
        %1686 = vmatprep.subr.mxu0 0.0
        %1687 = vmatpush2.msra.mxu0 0.0
        %1688 = vmatprep.subr.mxu0 0.0
        %1689 = vmatpush2.msra.mxu0 0.0
        %1690 = vmatprep.subr.mxu0 0.0
        %1691 = vmatpush2.msra.mxu0 0.0
        %1692 = vmatprep.subr.mxu0 0.0
        %1693 = vmatpush2.msra.mxu0 0.0
        %1694 = vmatprep.subr.mxu0 0.0
        %1695 = vmatpush2.msra.mxu0 0.0
        %1696 = vmatprep.subr.mxu0 0.0
        %1697 = vmatpush2.msra.mxu0 0.0
        %1698 = vmatprep.subr.mxu0 0.0
        %1699 = vmatpush2.msra.mxu0 0.0
        %1700 = vmatprep.subr.mxu0 0.0
        %1701 = vmatpush2.msra.mxu0 0.0
        %1702 = vmatprep.subr.mxu0 0.0
        %1703 = vmatpush2.msra.mxu0 0.0
        %1704 = vmatprep.subr.mxu0 0.0
        %1705 = vmatpush2.msra.mxu0 0.0
        %1706 = vmatprep.subr.mxu0 0.0
        %1707 = vmatpush2.msra.mxu0 0.0
        %1708 = vmatprep.subr.mxu0 0.0
        %1709 = vmatpush2.msra.mxu0 0.0
        %1710 = vmatprep.mubr.f32.mxu0 0.0
        %1711 = vmatmul.mubr.f32.gmra.mxu0 %v1455
        %v1712 = vpop.f32.mrf.mxu0
        %v1713 = vadd.f32 %v1135, %v1712
        %v1714 = vpop.f32.mrf.mxu0
        %1715 = vmatprep.mubr.f32.mxu0 0.0
        %1716 = vmatmul.mubr.f32.gmra.mxu0 %v1458
        %v1717 = vpop.f32.mrf.mxu0
        %v1718 = vadd.f32 %v1140, %v1717
        %v1719 = vpop.f32.mrf.mxu0
        %1720 = vmatprep.mubr.f32.mxu0 0.0
        %1721 = vmatmul.mubr.f32.gmra.mxu0 %v1461
        %v1722 = vpop.f32.mrf.mxu0
        %v1723 = vadd.f32 %v1145, %v1722
        %v1724 = vpop.f32.mrf.mxu0
        %1725 = vmatprep.mubr.f32.mxu0 0.0
        %1726 = vmatmul.mubr.f32.gmra.mxu0 %v1464
        %v1727 = vpop.f32.mrf.mxu0
        %v1728 = vadd.f32 %v1150, %v1727
        %v1729 = vpop.f32.mrf.mxu0
        %1730 = vmatprep.mubr.f32.mxu0 0.0
        %1731 = vmatmul.mubr.f32.gmra.mxu0 %v1467
        %v1732 = vpop.f32.mrf.mxu0
        %v1733 = vadd.f32 %v1155, %v1732
        %v1734 = vpop.f32.mrf.mxu0
        %1735 = vmatprep.mubr.f32.mxu0 0.0
        %1736 = vmatmul.mubr.f32.gmra.mxu0 %v1470
        %v1737 = vpop.f32.mrf.mxu0
        %v1738 = vadd.f32 %v1160, %v1737
        %v1739 = vpop.f32.mrf.mxu0
        %1740 = vmatprep.mubr.f32.mxu0 0.0
        %1741 = vmatmul.mubr.f32.gmra.mxu0 %v1473
        %v1742 = vpop.f32.mrf.mxu0
        %v1743 = vadd.f32 %v1165, %v1742
        %v1744 = vpop.f32.mrf.mxu0
        %1745 = vmatprep.mubr.f32.mxu0 0.0
        %1746 = vmatmul.mubr.f32.gmra.mxu0 %v1476
        %v1747 = vpop.f32.mrf.mxu0
        %v1748 = vadd.f32 %v1170, %v1747
        %v1749 = vpop.f32.mrf.mxu0
        %1750 = vmatprep.mubr.f32.mxu0 0.0
        %1751 = vmatmul.mubr.f32.gmra.mxu0 %v1479
        %v1752 = vpop.f32.mrf.mxu0
        %v1753 = vadd.f32 %v1175, %v1752
        %v1754 = vpop.f32.mrf.mxu0
        %1755 = vmatprep.mubr.f32.mxu0 0.0
        %1756 = vmatmul.mubr.f32.gmra.mxu0 %v1482
        %v1757 = vpop.f32.mrf.mxu0
        %v1758 = vadd.f32 %v1180, %v1757
        %v1759 = vpop.f32.mrf.mxu0
        %1760 = vmatprep.mubr.f32.mxu0 0.0
        %1761 = vmatmul.mubr.f32.gmra.mxu0 %v1485
        %v1762 = vpop.f32.mrf.mxu0
        %v1763 = vadd.f32 %v1185, %v1762
        %v1764 = vpop.f32.mrf.mxu0
        %1765 = vmatprep.mubr.f32.mxu0 0.0
        %1766 = vmatmul.mubr.f32.gmra.mxu0 %v1488
        %v1767 = vpop.f32.mrf.mxu0
        %v1768 = vadd.f32 %v1190, %v1767
        %v1769 = vpop.f32.mrf.mxu0
        %1770 = vmatprep.mubr.f32.mxu0 0.0
        %1771 = vmatmul.mubr.f32.gmra.mxu0 %v1491
        %v1772 = vpop.f32.mrf.mxu0
        %v1773 = vadd.f32 %v1195, %v1772
        %v1774 = vpop.f32.mrf.mxu0
        %1775 = vmatprep.mubr.f32.mxu0 0.0
        %1776 = vmatmul.mubr.f32.gmra.mxu0 %v1494
        %v1777 = vpop.f32.mrf.mxu0
        %v1778 = vadd.f32 %v1200, %v1777
        %v1779 = vpop.f32.mrf.mxu0
        %1780 = vmatprep.mubr.f32.mxu0 0.0
        %1781 = vmatmul.mubr.f32.gmra.mxu0 %v1497
        %v1782 = vpop.f32.mrf.mxu0
        %v1783 = vadd.f32 %v1205, %v1782
        %v1784 = vpop.f32.mrf.mxu0
        %1785 = vmatprep.mubr.f32.mxu0 0.0
        %1786 = vmatmul.mubr.f32.gmra.mxu0 %v1500
        %v1787 = vpop.f32.mrf.mxu0
        %v1788 = vadd.f32 %v1210, %v1787
        %v1789 = vpop.f32.mrf.mxu0
        %1790 = vmatprep.mubr.f32.mxu0 0.0
        %1791 = vmatmul.mubr.f32.gmra.mxu0 %v1503
        %v1792 = vpop.f32.mrf.mxu0
        %v1793 = vadd.f32 %v1215, %v1792
        %v1794 = vpop.f32.mrf.mxu0
        %1795 = vmatprep.mubr.f32.mxu0 0.0
        %1796 = vmatmul.mubr.f32.gmra.mxu0 %v1506
        %v1797 = vpop.f32.mrf.mxu0
        %v1798 = vadd.f32 %v1220, %v1797
        %v1799 = vpop.f32.mrf.mxu0
        %1800 = vmatprep.mubr.f32.mxu0 0.0
        %1801 = vmatmul.mubr.f32.gmra.mxu0 %v1509
        %v1802 = vpop.f32.mrf.mxu0
        %v1803 = vadd.f32 %v1225, %v1802
        %v1804 = vpop.f32.mrf.mxu0
        %1805 = vmatprep.mubr.f32.mxu0 0.0
        %1806 = vmatmul.mubr.f32.gmra.mxu0 %v1512
        %v1807 = vpop.f32.mrf.mxu0
        %v1808 = vadd.f32 %v1230, %v1807
        %v1809 = vpop.f32.mrf.mxu0
        %1810 = vmatprep.mubr.f32.mxu0 0.0
        %1811 = vmatmul.mubr.f32.gmra.mxu0 %v1515
        %v1812 = vpop.f32.mrf.mxu0
        %v1813 = vadd.f32 %v1235, %v1812
        %v1814 = vpop.f32.mrf.mxu0
        %1815 = vmatprep.mubr.f32.mxu0 0.0
        %1816 = vmatmul.mubr.f32.gmra.mxu0 %v1518
        %v1817 = vpop.f32.mrf.mxu0
        %v1818 = vadd.f32 %v1240, %v1817
        %v1819 = vpop.f32.mrf.mxu0
        %1820 = vmatprep.mubr.f32.mxu0 0.0
        %1821 = vmatmul.mubr.f32.gmra.mxu0 %v1521
        %v1822 = vpop.f32.mrf.mxu0
        %v1823 = vadd.f32 %v1245, %v1822
        %v1824 = vpop.f32.mrf.mxu0
        %1825 = vmatprep.mubr.f32.mxu0 0.0
        %1826 = vmatmul.mubr.f32.gmra.mxu0 %v1524
        %v1827 = vpop.f32.mrf.mxu0
        %v1828 = vadd.f32 %v1250, %v1827
        %v1829 = vpop.f32.mrf.mxu0
        %1830 = vmatprep.mubr.f32.mxu0 0.0
        %1831 = vmatmul.mubr.f32.gmra.mxu0 %v1527
        %v1832 = vpop.f32.mrf.mxu0
        %v1833 = vadd.f32 %v1255, %v1832
        %v1834 = vpop.f32.mrf.mxu0
        %1835 = vmatprep.mubr.f32.mxu0 0.0
        %1836 = vmatmul.mubr.f32.gmra.mxu0 %v1530
        %v1837 = vpop.f32.mrf.mxu0
        %v1838 = vadd.f32 %v1260, %v1837
        %v1839 = vpop.f32.mrf.mxu0
        %1840 = vmatprep.mubr.f32.mxu0 0.0
        %1841 = vmatmul.mubr.f32.gmra.mxu0 %v1533
        %v1842 = vpop.f32.mrf.mxu0
        %v1843 = vadd.f32 %v1265, %v1842
        %v1844 = vpop.f32.mrf.mxu0
        %1845 = vmatprep.mubr.f32.mxu0 0.0
        %1846 = vmatmul.mubr.f32.gmra.mxu0 %v1536
        %v1847 = vpop.f32.mrf.mxu0
        %v1848 = vadd.f32 %v1270, %v1847
        %v1849 = vpop.f32.mrf.mxu0
        %1850 = vmatprep.mubr.f32.mxu0 0.0
        %1851 = vmatmul.mubr.f32.gmra.mxu0 %v1539
        %v1852 = vpop.f32.mrf.mxu0
        %v1853 = vadd.f32 %v1275, %v1852
        %v1854 = vpop.f32.mrf.mxu0
        %1855 = vmatprep.mubr.f32.mxu0 0.0
        %1856 = vmatmul.mubr.f32.gmra.mxu0 %v1542
        %v1857 = vpop.f32.mrf.mxu0
        %v1858 = vadd.f32 %v1280, %v1857
        %v1859 = vpop.f32.mrf.mxu0
        %1860 = vmatprep.mubr.f32.mxu0 0.0
        %1861 = vmatmul.mubr.f32.gmra.mxu0 %v1545
        %v1862 = vpop.f32.mrf.mxu0
        %v1863 = vadd.f32 %v1285, %v1862
        %v1864 = vpop.f32.mrf.mxu0
        %1865 = vmatprep.mubr.f32.mxu0 0.0
        %1866 = vmatmul.mubr.f32.gmra.mxu0 %v1548
        %v1867 = vpop.f32.mrf.mxu0
        %v1868 = vadd.f32 %v1290, %v1867
        %v1869 = vpop.f32.mrf.mxu0
        %1870 = vmatprep.mubr.f32.mxu0 0.0
        %1871 = vmatmul.mubr.f32.gmra.mxu0 %v1551
        %v1872 = vpop.f32.mrf.mxu0
        %v1873 = vadd.f32 %v1295, %v1872
        %v1874 = vpop.f32.mrf.mxu0
        %1875 = vmatprep.mubr.f32.mxu0 0.0
        %1876 = vmatmul.mubr.f32.gmra.mxu0 %v1554
        %v1877 = vpop.f32.mrf.mxu0
        %v1878 = vadd.f32 %v1300, %v1877
        %v1879 = vpop.f32.mrf.mxu0
        %1880 = vmatprep.mubr.f32.mxu0 0.0
        %1881 = vmatmul.mubr.f32.gmra.mxu0 %v1557
        %v1882 = vpop.f32.mrf.mxu0
        %v1883 = vadd.f32 %v1305, %v1882
        %v1884 = vpop.f32.mrf.mxu0
        %1885 = vmatprep.mubr.f32.mxu0 0.0
        %1886 = vmatmul.mubr.f32.gmra.mxu0 %v1560
        %v1887 = vpop.f32.mrf.mxu0
        %v1888 = vadd.f32 %v1310, %v1887
        %v1889 = vpop.f32.mrf.mxu0
        %1890 = vmatprep.mubr.f32.mxu0 0.0
        %1891 = vmatmul.mubr.f32.gmra.mxu0 %v1563
        %v1892 = vpop.f32.mrf.mxu0
        %v1893 = vadd.f32 %v1315, %v1892
        %v1894 = vpop.f32.mrf.mxu0
        %1895 = vmatprep.mubr.f32.mxu0 0.0
        %1896 = vmatmul.mubr.f32.gmra.mxu0 %v1566
        %v1897 = vpop.f32.mrf.mxu0
        %v1898 = vadd.f32 %v1320, %v1897
        %v1899 = vpop.f32.mrf.mxu0
        %1900 = vmatprep.mubr.f32.mxu0 0.0
        %1901 = vmatmul.mubr.f32.gmra.mxu0 %v1569
        %v1902 = vpop.f32.mrf.mxu0
        %v1903 = vadd.f32 %v1325, %v1902
        %v1904 = vpop.f32.mrf.mxu0
        %1905 = vmatprep.mubr.f32.mxu0 0.0
        %1906 = vmatmul.mubr.f32.gmra.mxu0 %v1572
        %v1907 = vpop.f32.mrf.mxu0
        %v1908 = vadd.f32 %v1330, %v1907
        %v1909 = vpop.f32.mrf.mxu0
        %1910 = vmatprep.mubr.f32.mxu0 0.0
        %1911 = vmatmul.mubr.f32.gmra.mxu0 %v1575
        %v1912 = vpop.f32.mrf.mxu0
        %v1913 = vadd.f32 %v1335, %v1912
        %v1914 = vpop.f32.mrf.mxu0
        %1915 = vmatprep.mubr.f32.mxu0 0.0
        %1916 = vmatmul.mubr.f32.gmra.mxu0 %v1578
        %v1917 = vpop.f32.mrf.mxu0
        %v1918 = vadd.f32 %v1340, %v1917
        %v1919 = vpop.f32.mrf.mxu0
        %1920 = vmatprep.mubr.f32.mxu0 0.0
        %1921 = vmatmul.mubr.f32.gmra.mxu0 %v1581
        %v1922 = vpop.f32.mrf.mxu0
        %v1923 = vadd.f32 %v1345, %v1922
        %v1924 = vpop.f32.mrf.mxu0
        %1925 = vmatprep.mubr.f32.mxu0 0.0
        %1926 = vmatmul.mubr.f32.gmra.mxu0 %v1584
        %v1927 = vpop.f32.mrf.mxu0
        %v1928 = vadd.f32 %v1350, %v1927
        %v1929 = vpop.f32.mrf.mxu0
        %1930 = vmatprep.mubr.f32.mxu0 0.0
        %1931 = vmatmul.mubr.f32.gmra.mxu0 %v1587
        %v1932 = vpop.f32.mrf.mxu0
        %v1933 = vadd.f32 %v1355, %v1932
        %v1934 = vpop.f32.mrf.mxu0
        %1935 = vmatprep.mubr.f32.mxu0 0.0
        %1936 = vmatmul.mubr.f32.gmra.mxu0 %v1590
        %v1937 = vpop.f32.mrf.mxu0
        %v1938 = vadd.f32 %v1360, %v1937
        %v1939 = vpop.f32.mrf.mxu0
        %1940 = vmatprep.mubr.f32.mxu0 0.0
        %1941 = vmatmul.mubr.f32.gmra.mxu0 %v1593
        %v1942 = vpop.f32.mrf.mxu0
        %v1943 = vadd.f32 %v1365, %v1942
        %v1944 = vpop.f32.mrf.mxu0
        %1945 = vmatprep.mubr.f32.mxu0 0.0
        %1946 = vmatmul.mubr.f32.gmra.mxu0 %v1596
        %v1947 = vpop.f32.mrf.mxu0
        %v1948 = vadd.f32 %v1370, %v1947
        %v1949 = vpop.f32.mrf.mxu0
        %1950 = vmatprep.mubr.f32.mxu0 0.0
        %1951 = vmatmul.mubr.f32.gmra.mxu0 %v1599
        %v1952 = vpop.f32.mrf.mxu0
        %v1953 = vadd.f32 %v1375, %v1952
        %v1954 = vpop.f32.mrf.mxu0
        %1955 = vmatprep.mubr.f32.mxu0 0.0
        %1956 = vmatmul.mubr.f32.gmra.mxu0 %v1602
        %v1957 = vpop.f32.mrf.mxu0
        %v1958 = vadd.f32 %v1380, %v1957
        %v1959 = vpop.f32.mrf.mxu0
        %1960 = vmatprep.mubr.f32.mxu0 0.0
        %1961 = vmatmul.mubr.f32.gmra.mxu0 %v1605
        %v1962 = vpop.f32.mrf.mxu0
        %v1963 = vadd.f32 %v1385, %v1962
        %v1964 = vpop.f32.mrf.mxu0
        %1965 = vmatprep.mubr.f32.mxu0 0.0
        %1966 = vmatmul.mubr.f32.gmra.mxu0 %v1608
        %v1967 = vpop.f32.mrf.mxu0
        %v1968 = vadd.f32 %v1390, %v1967
        %v1969 = vpop.f32.mrf.mxu0
        %1970 = vmatprep.mubr.f32.mxu0 0.0
        %1971 = vmatmul.mubr.f32.gmra.mxu0 %v1611
        %v1972 = vpop.f32.mrf.mxu0
        %v1973 = vadd.f32 %v1395, %v1972
        %v1974 = vpop.f32.mrf.mxu0
        %1975 = vmatprep.mubr.f32.mxu0 0.0
        %1976 = vmatmul.mubr.f32.gmra.mxu0 %v1614
        %v1977 = vpop.f32.mrf.mxu0
        %v1978 = vadd.f32 %v1400, %v1977
        %v1979 = vpop.f32.mrf.mxu0
        %1980 = vmatprep.mubr.f32.mxu0 0.0
        %1981 = vmatmul.mubr.f32.gmra.mxu0 %v1617
        %v1982 = vpop.f32.mrf.mxu0
        %v1983 = vadd.f32 %v1405, %v1982
        %v1984 = vpop.f32.mrf.mxu0
        %1985 = vmatprep.mubr.f32.mxu0 0.0
        %1986 = vmatmul.mubr.f32.gmra.mxu0 %v1620
        %v1987 = vpop.f32.mrf.mxu0
        %v1988 = vadd.f32 %v1410, %v1987
        %v1989 = vpop.f32.mrf.mxu0
        %1990 = vmatprep.mubr.f32.mxu0 0.0
        %1991 = vmatmul.mubr.f32.gmra.mxu0 %v1623
        %v1992 = vpop.f32.mrf.mxu0
        %v1993 = vadd.f32 %v1415, %v1992
        %v1994 = vpop.f32.mrf.mxu0
        %1995 = vmatprep.mubr.f32.mxu0 0.0
        %1996 = vmatmul.mubr.f32.gmra.mxu0 %v1626
        %v1997 = vpop.f32.mrf.mxu0
        %v1998 = vadd.f32 %v1420, %v1997
        %v1999 = vpop.f32.mrf.mxu0
        %2000 = vmatprep.mubr.f32.mxu0 0.0
        %2001 = vmatmul.mubr.f32.gmra.mxu0 %v1629
        %v2002 = vpop.f32.mrf.mxu0
        %v2003 = vadd.f32 %v1425, %v2002
        %v2004 = vpop.f32.mrf.mxu0
        %2005 = vmatprep.mubr.f32.mxu0 0.0
        %2006 = vmatmul.mubr.f32.gmra.mxu0 %v1632
        %v2007 = vpop.f32.mrf.mxu0
        %v2008 = vadd.f32 %v1430, %v2007
        %v2009 = vpop.f32.mrf.mxu0
        %2010 = vmatprep.mubr.f32.mxu0 0.0
        %2011 = vmatmul.mubr.f32.gmra.mxu0 %v1635
        %v2012 = vpop.f32.mrf.mxu0
        %v2013 = vadd.f32 %v1435, %v2012
        %v2014 = vpop.f32.mrf.mxu0
        %2015 = vmatprep.mubr.f32.mxu0 0.0
        %2016 = vmatmul.mubr.f32.gmra.mxu0 %v1638
        %v2017 = vpop.f32.mrf.mxu0
        %v2018 = vadd.f32 %v1440, %v2017
        %v2019 = vpop.f32.mrf.mxu0
        %2020 = vmatprep.mubr.f32.mxu0 0.0
        %2021 = vmatmul.mubr.f32.gmra.mxu0 %v1641
        %v2022 = vpop.f32.mrf.mxu0
        %v2023 = vadd.f32 %v1445, %v2022
        %v2024 = vpop.f32.mrf.mxu0
        %2025 = vmatprep.mubr.f32.mxu0 0.0
        %2026 = vmatmul.mubr.f32.gmra.mxu0 %v1644
        %v2027 = vpop.f32.mrf.mxu0
        %v2028 = vadd.f32 %v1450, %v2027
        %v2029 = vpop.f32.mrf.mxu0
        %2030 = vdwg.mxu0
        %v2031 = vld [vmem:[%s4] sm:$0x1]
        %v2033 = vlaneseq
        %v2034 = vshrl.u32 %v2033, 7
        %v2035 = vsub.s32 0, %v2034
        %v2036 = vrot.slane %v2031, %v2035
        %v2038 = vadd.f32 %v1713, %v2036
        %v2039 = vadd.f32 %v1718, %v2036
        %v2040 = vadd.f32 %v1723, %v2036
        %v2041 = vadd.f32 %v1728, %v2036
        %v2042 = vadd.f32 %v1733, %v2036
        %v2043 = vadd.f32 %v1738, %v2036
        %v2044 = vadd.f32 %v1743, %v2036
        %v2045 = vadd.f32 %v1748, %v2036
        %v2046 = vadd.f32 %v1753, %v2036
        %v2047 = vadd.f32 %v1758, %v2036
        %v2048 = vadd.f32 %v1763, %v2036
        %v2049 = vadd.f32 %v1768, %v2036
        %v2050 = vadd.f32 %v1773, %v2036
        %v2051 = vadd.f32 %v1778, %v2036
        %v2052 = vadd.f32 %v1783, %v2036
        %v2053 = vadd.f32 %v1788, %v2036
        %v2054 = vadd.f32 %v1793, %v2036
        %v2055 = vadd.f32 %v1798, %v2036
        %v2056 = vadd.f32 %v1803, %v2036
        %v2057 = vadd.f32 %v1808, %v2036
        %v2058 = vadd.f32 %v1813, %v2036
        %v2059 = vadd.f32 %v1818, %v2036
        %v2060 = vadd.f32 %v1823, %v2036
        %v2061 = vadd.f32 %v1828, %v2036
        %v2062 = vadd.f32 %v1833, %v2036
        %v2063 = vadd.f32 %v1838, %v2036
        %v2064 = vadd.f32 %v1843, %v2036
        %v2065 = vadd.f32 %v1848, %v2036
        %v2066 = vadd.f32 %v1853, %v2036
        %v2067 = vadd.f32 %v1858, %v2036
        %v2068 = vadd.f32 %v1863, %v2036
        %v2069 = vadd.f32 %v1868, %v2036
        %v2070 = vadd.f32 %v1873, %v2036
        %v2071 = vadd.f32 %v1878, %v2036
        %v2072 = vadd.f32 %v1883, %v2036
        %v2073 = vadd.f32 %v1888, %v2036
        %v2074 = vadd.f32 %v1893, %v2036
        %v2075 = vadd.f32 %v1898, %v2036
        %v2076 = vadd.f32 %v1903, %v2036
        %v2077 = vadd.f32 %v1908, %v2036
        %v2078 = vadd.f32 %v1913, %v2036
        %v2079 = vadd.f32 %v1918, %v2036
        %v2080 = vadd.f32 %v1923, %v2036
        %v2081 = vadd.f32 %v1928, %v2036
        %v2082 = vadd.f32 %v1933, %v2036
        %v2083 = vadd.f32 %v1938, %v2036
        %v2084 = vadd.f32 %v1943, %v2036
        %v2085 = vadd.f32 %v1948, %v2036
        %v2086 = vadd.f32 %v1953, %v2036
        %v2087 = vadd.f32 %v1958, %v2036
        %v2088 = vadd.f32 %v1963, %v2036
        %v2089 = vadd.f32 %v1968, %v2036
        %v2090 = vadd.f32 %v1973, %v2036
        %v2091 = vadd.f32 %v1978, %v2036
        %v2092 = vadd.f32 %v1983, %v2036
        %v2093 = vadd.f32 %v1988, %v2036
        %v2094 = vadd.f32 %v1993, %v2036
        %v2095 = vadd.f32 %v1998, %v2036
        %v2096 = vadd.f32 %v2003, %v2036
        %v2097 = vadd.f32 %v2008, %v2036
        %v2098 = vadd.f32 %v2013, %v2036
        %v2099 = vadd.f32 %v2018, %v2036
        %v2100 = vadd.f32 %v2023, %v2036
        %v2101 = vadd.f32 %v2028, %v2036
        %v2102 = vtanh.pop %v2038
        %v2103 = vtanh.pop %v2039
        %v2104 = vtanh.pop %v2040
        %v2105 = vtanh.pop %v2041
        %v2106 = vtanh.pop %v2042
        %v2107 = vtanh.pop %v2043
        %v2108 = vtanh.pop %v2044
        %v2109 = vtanh.pop %v2045
        %v2110 = vtanh.pop %v2046
        %v2111 = vtanh.pop %v2047
        %v2112 = vtanh.pop %v2048
        %v2113 = vtanh.pop %v2049
        %v2114 = vtanh.pop %v2050
        %v2115 = vtanh.pop %v2051
        %v2116 = vtanh.pop %v2052
        %v2117 = vtanh.pop %v2053
        %v2118 = vtanh.pop %v2054
        %v2119 = vtanh.pop %v2055
        %v2120 = vtanh.pop %v2056
        %v2121 = vtanh.pop %v2057
        %v2122 = vtanh.pop %v2058
        %v2123 = vtanh.pop %v2059
        %v2124 = vtanh.pop %v2060
        %v2125 = vtanh.pop %v2061
        %v2126 = vtanh.pop %v2062
        %v2127 = vtanh.pop %v2063
        %v2128 = vtanh.pop %v2064
        %v2129 = vtanh.pop %v2065
        %v2130 = vtanh.pop %v2066
        %v2131 = vtanh.pop %v2067
        %v2132 = vtanh.pop %v2068
        %v2133 = vtanh.pop %v2069
        %v2134 = vtanh.pop %v2070
        %v2135 = vtanh.pop %v2071
        %v2136 = vtanh.pop %v2072
        %v2137 = vtanh.pop %v2073
        %v2138 = vtanh.pop %v2074
        %v2139 = vtanh.pop %v2075
        %v2140 = vtanh.pop %v2076
        %v2141 = vtanh.pop %v2077
        %v2142 = vtanh.pop %v2078
        %v2143 = vtanh.pop %v2079
        %v2144 = vtanh.pop %v2080
        %v2145 = vtanh.pop %v2081
        %v2146 = vtanh.pop %v2082
        %v2147 = vtanh.pop %v2083
        %v2148 = vtanh.pop %v2084
        %v2149 = vtanh.pop %v2085
        %v2150 = vtanh.pop %v2086
        %v2151 = vtanh.pop %v2087
        %v2152 = vtanh.pop %v2088
        %v2153 = vtanh.pop %v2089
        %v2154 = vtanh.pop %v2090
        %v2155 = vtanh.pop %v2091
        %v2156 = vtanh.pop %v2092
        %v2157 = vtanh.pop %v2093
        %v2158 = vtanh.pop %v2094
        %v2159 = vtanh.pop %v2095
        %v2160 = vtanh.pop %v2096
        %v2161 = vtanh.pop %v2097
        %v2162 = vtanh.pop %v2098
        %v2163 = vtanh.pop %v2099
        %v2164 = vtanh.pop %v2100
        %v2165 = vtanh.pop %v2101
        %v2166 = vld [vmem:[%s5] sm:$0xff]
        %v2167 = vld [vmem:[%s5 + $0x8] sm:$0xff]
        %v2168 = vld [vmem:[%s5 + $0x10] sm:$0xff]
        %v2169 = vld [vmem:[%s5 + $0x18] sm:$0xff]
        %v2170 = vld [vmem:[%s6] sm:$0x1]
        %v2172 = vlaneseq
        %v2173 = vshrl.u32 %v2172, 7
        %v2174 = vsub.s32 0, %v2173
        %v2175 = vrot.slane %v2170, %v2174
        %vm2177 = vcmask 261120
        %v2179 = vsel %vm2177, %v2102, 0
        %v2182 = vsel %vm2177, %v2103, 0
        %v2185 = vsel %vm2177, %v2104, 0
        %v2188 = vsel %vm2177, %v2105, 0
        %v2191 = vsel %vm2177, %v2106, 0
        %v2194 = vsel %vm2177, %v2107, 0
        %v2197 = vsel %vm2177, %v2108, 0
        %v2200 = vsel %vm2177, %v2109, 0
        %v2203 = vsel %vm2177, %v2110, 0
        %v2206 = vsel %vm2177, %v2111, 0
        %v2209 = vsel %vm2177, %v2112, 0
        %v2212 = vsel %vm2177, %v2113, 0
        %v2215 = vsel %vm2177, %v2114, 0
        %v2218 = vsel %vm2177, %v2115, 0
        %v2221 = vsel %vm2177, %v2116, 0
        %v2224 = vsel %vm2177, %v2117, 0
        %v2227 = vsel %vm2177, %v2118, 0
        %v2230 = vsel %vm2177, %v2119, 0
        %v2233 = vsel %vm2177, %v2120, 0
        %v2236 = vsel %vm2177, %v2121, 0
        %v2239 = vsel %vm2177, %v2122, 0
        %v2242 = vsel %vm2177, %v2123, 0
        %v2245 = vsel %vm2177, %v2124, 0
        %v2248 = vsel %vm2177, %v2125, 0
        %v2251 = vsel %vm2177, %v2126, 0
        %v2254 = vsel %vm2177, %v2127, 0
        %v2257 = vsel %vm2177, %v2128, 0
        %v2260 = vsel %vm2177, %v2129, 0
        %v2263 = vsel %vm2177, %v2130, 0
        %v2266 = vsel %vm2177, %v2131, 0
        %v2269 = vsel %vm2177, %v2132, 0
        %v2272 = vsel %vm2177, %v2133, 0
        %v2275 = vsel %vm2177, %v2134, 0
        %v2278 = vsel %vm2177, %v2135, 0
        %v2281 = vsel %vm2177, %v2136, 0
        %v2284 = vsel %vm2177, %v2137, 0
        %v2287 = vsel %vm2177, %v2138, 0
        %v2290 = vsel %vm2177, %v2139, 0
        %v2293 = vsel %vm2177, %v2140, 0
        %v2296 = vsel %vm2177, %v2141, 0
        %v2299 = vsel %vm2177, %v2142, 0
        %v2302 = vsel %vm2177, %v2143, 0
        %v2305 = vsel %vm2177, %v2144, 0
        %v2308 = vsel %vm2177, %v2145, 0
        %v2311 = vsel %vm2177, %v2146, 0
        %v2314 = vsel %vm2177, %v2147, 0
        %v2317 = vsel %vm2177, %v2148, 0
        %v2320 = vsel %vm2177, %v2149, 0
        %v2323 = vsel %vm2177, %v2150, 0
        %v2326 = vsel %vm2177, %v2151, 0
        %v2329 = vsel %vm2177, %v2152, 0
        %v2332 = vsel %vm2177, %v2153, 0
        %v2335 = vsel %vm2177, %v2154, 0
        %v2338 = vsel %vm2177, %v2155, 0
        %v2341 = vsel %vm2177, %v2156, 0
        %v2344 = vsel %vm2177, %v2157, 0
        %v2347 = vsel %vm2177, %v2158, 0
        %v2350 = vsel %vm2177, %v2159, 0
        %v2353 = vsel %vm2177, %v2160, 0
        %v2356 = vsel %vm2177, %v2161, 0
        %v2359 = vsel %vm2177, %v2162, 0
        %v2362 = vsel %vm2177, %v2163, 0
        %v2365 = vsel %vm2177, %v2164, 0
        %v2368 = vsel %vm2177, %v2165, 0
        %2370 = vmatprep.subr.mxu0 0.0
        %2371 = vmatpush1.msra.mxu0 0.0
        %2372 = vmatprep.subr.mxu0 0.0
        %2373 = vmatpush1.msra.mxu0 0.0
        %2374 = vmatprep.subr.mxu0 0.0
        %2375 = vmatpush1.msra.mxu0 0.0
        %2376 = vmatprep.subr.mxu0 0.0
        %2377 = vmatpush1.msra.mxu0 0.0
        %2378 = vmatprep.subr.mxu0 0.0
        %2379 = vmatpush1.msra.mxu0 0.0
        %2380 = vmatprep.subr.mxu0 0.0
        %2381 = vmatpush1.msra.mxu0 0.0
        %2382 = vmatprep.subr.mxu0 0.0
        %2383 = vmatpush1.msra.mxu0 0.0
        %2384 = vmatprep.subr.mxu0 0.0
        %2385 = vmatpush1.msra.mxu0 0.0
        %2386 = vmatprep.subr.mxu0 0.0
        %2387 = vmatpush1.msra.mxu0 0.0
        %2388 = vmatprep.subr.mxu0 0.0
        %2389 = vmatpush1.msra.mxu0 0.0
        %2390 = vmatprep.subr.mxu0 0.0
        %2391 = vmatpush1.msra.mxu0 0.0
        %2392 = vmatprep.subr.mxu0 0.0
        %2393 = vmatpush1.msra.mxu0 0.0
        %2394 = vmatprep.subr.mxu0 0.0
        %2395 = vmatpush1.msra.mxu0 %v2169
        %2396 = vmatprep.subr.mxu0 0.0
        %2397 = vmatpush1.msra.mxu0 %v2168
        %2398 = vmatprep.subr.mxu0 0.0
        %2399 = vmatpush1.msra.mxu0 %v2167
        %2400 = vmatprep.subr.mxu0 0.0
        %2401 = vmatpush1.msra.mxu0 %v2166
        %2402 = vmatprep.subr.mxu0 0.0
        %2403 = vmatpush2.msra.mxu0 0.0
        %2404 = vmatprep.subr.mxu0 0.0
        %2405 = vmatpush2.msra.mxu0 0.0
        %2406 = vmatprep.subr.mxu0 0.0
        %2407 = vmatpush2.msra.mxu0 0.0
        %2408 = vmatprep.subr.mxu0 0.0
        %2409 = vmatpush2.msra.mxu0 0.0
        %2410 = vmatprep.subr.mxu0 0.0
        %2411 = vmatpush2.msra.mxu0 0.0
        %2412 = vmatprep.subr.mxu0 0.0
        %2413 = vmatpush2.msra.mxu0 0.0
        %2414 = vmatprep.subr.mxu0 0.0
        %2415 = vmatpush2.msra.mxu0 0.0
        %2416 = vmatprep.subr.mxu0 0.0
        %2417 = vmatpush2.msra.mxu0 0.0
        %2418 = vmatprep.subr.mxu0 0.0
        %2419 = vmatpush2.msra.mxu0 0.0
        %2420 = vmatprep.subr.mxu0 0.0
        %2421 = vmatpush2.msra.mxu0 0.0
        %2422 = vmatprep.subr.mxu0 0.0
        %2423 = vmatpush2.msra.mxu0 0.0
        %2424 = vmatprep.subr.mxu0 0.0
        %2425 = vmatpush2.msra.mxu0 0.0
        %2426 = vmatprep.subr.mxu0 0.0
        %2427 = vmatpush2.msra.mxu0 0.0
        %2428 = vmatprep.subr.mxu0 0.0
        %2429 = vmatpush2.msra.mxu0 0.0
        %2430 = vmatprep.subr.mxu0 0.0
        %2431 = vmatpush2.msra.mxu0 0.0
        %2432 = vmatprep.subr.mxu0 0.0
        %2433 = vmatpush2.msra.mxu0 0.0
        %2434 = vmatprep.mubr.f32.mxu0 0.0
        %2435 = vmatmul.mubr.f32.gmra.mxu0 %v2179
        %v2436 = vpop.f32.mrf.mxu0
        %v2437 = vadd.f32 %v2175, %v2436
        %v2438 = vpop.f32.mrf.mxu0
        %2439 = vmatprep.mubr.f32.mxu0 0.0
        %2440 = vmatmul.mubr.f32.gmra.mxu0 %v2182
        %v2441 = vpop.f32.mrf.mxu0
        %v2442 = vadd.f32 %v2175, %v2441
        %v2443 = vpop.f32.mrf.mxu0
        %2444 = vmatprep.mubr.f32.mxu0 0.0
        %2445 = vmatmul.mubr.f32.gmra.mxu0 %v2185
        %v2446 = vpop.f32.mrf.mxu0
        %v2447 = vadd.f32 %v2175, %v2446
        %v2448 = vpop.f32.mrf.mxu0
        %2449 = vmatprep.mubr.f32.mxu0 0.0
        %2450 = vmatmul.mubr.f32.gmra.mxu0 %v2188
        %v2451 = vpop.f32.mrf.mxu0
        %v2452 = vadd.f32 %v2175, %v2451
        %v2453 = vpop.f32.mrf.mxu0
        %2454 = vmatprep.mubr.f32.mxu0 0.0
        %2455 = vmatmul.mubr.f32.gmra.mxu0 %v2191
        %v2456 = vpop.f32.mrf.mxu0
        %v2457 = vadd.f32 %v2175, %v2456
        %v2458 = vpop.f32.mrf.mxu0
        %2459 = vmatprep.mubr.f32.mxu0 0.0
        %2460 = vmatmul.mubr.f32.gmra.mxu0 %v2194
        %v2461 = vpop.f32.mrf.mxu0
        %v2462 = vadd.f32 %v2175, %v2461
        %v2463 = vpop.f32.mrf.mxu0
        %2464 = vmatprep.mubr.f32.mxu0 0.0
        %2465 = vmatmul.mubr.f32.gmra.mxu0 %v2197
        %v2466 = vpop.f32.mrf.mxu0
        %v2467 = vadd.f32 %v2175, %v2466
        %v2468 = vpop.f32.mrf.mxu0
        %2469 = vmatprep.mubr.f32.mxu0 0.0
        %2470 = vmatmul.mubr.f32.gmra.mxu0 %v2200
        %v2471 = vpop.f32.mrf.mxu0
        %v2472 = vadd.f32 %v2175, %v2471
        %v2473 = vpop.f32.mrf.mxu0
        %2474 = vmatprep.mubr.f32.mxu0 0.0
        %2475 = vmatmul.mubr.f32.gmra.mxu0 %v2203
        %v2476 = vpop.f32.mrf.mxu0
        %v2477 = vadd.f32 %v2175, %v2476
        %v2478 = vpop.f32.mrf.mxu0
        %2479 = vmatprep.mubr.f32.mxu0 0.0
        %2480 = vmatmul.mubr.f32.gmra.mxu0 %v2206
        %v2481 = vpop.f32.mrf.mxu0
        %v2482 = vadd.f32 %v2175, %v2481
        %v2483 = vpop.f32.mrf.mxu0
        %2484 = vmatprep.mubr.f32.mxu0 0.0
        %2485 = vmatmul.mubr.f32.gmra.mxu0 %v2209
        %v2486 = vpop.f32.mrf.mxu0
        %v2487 = vadd.f32 %v2175, %v2486
        %v2488 = vpop.f32.mrf.mxu0
        %2489 = vmatprep.mubr.f32.mxu0 0.0
        %2490 = vmatmul.mubr.f32.gmra.mxu0 %v2212
        %v2491 = vpop.f32.mrf.mxu0
        %v2492 = vadd.f32 %v2175, %v2491
        %v2493 = vpop.f32.mrf.mxu0
        %2494 = vmatprep.mubr.f32.mxu0 0.0
        %2495 = vmatmul.mubr.f32.gmra.mxu0 %v2215
        %v2496 = vpop.f32.mrf.mxu0
        %v2497 = vadd.f32 %v2175, %v2496
        %v2498 = vpop.f32.mrf.mxu0
        %2499 = vmatprep.mubr.f32.mxu0 0.0
        %2500 = vmatmul.mubr.f32.gmra.mxu0 %v2218
        %v2501 = vpop.f32.mrf.mxu0
        %v2502 = vadd.f32 %v2175, %v2501
        %v2503 = vpop.f32.mrf.mxu0
        %2504 = vmatprep.mubr.f32.mxu0 0.0
        %2505 = vmatmul.mubr.f32.gmra.mxu0 %v2221
        %v2506 = vpop.f32.mrf.mxu0
        %v2507 = vadd.f32 %v2175, %v2506
        %v2508 = vpop.f32.mrf.mxu0
        %2509 = vmatprep.mubr.f32.mxu0 0.0
        %2510 = vmatmul.mubr.f32.gmra.mxu0 %v2224
        %v2511 = vpop.f32.mrf.mxu0
        %v2512 = vadd.f32 %v2175, %v2511
        %v2513 = vpop.f32.mrf.mxu0
        %2514 = vmatprep.mubr.f32.mxu0 0.0
        %2515 = vmatmul.mubr.f32.gmra.mxu0 %v2227
        %v2516 = vpop.f32.mrf.mxu0
        %v2517 = vadd.f32 %v2175, %v2516
        %v2518 = vpop.f32.mrf.mxu0
        %2519 = vmatprep.mubr.f32.mxu0 0.0
        %2520 = vmatmul.mubr.f32.gmra.mxu0 %v2230
        %v2521 = vpop.f32.mrf.mxu0
        %v2522 = vadd.f32 %v2175, %v2521
        %v2523 = vpop.f32.mrf.mxu0
        %2524 = vmatprep.mubr.f32.mxu0 0.0
        %2525 = vmatmul.mubr.f32.gmra.mxu0 %v2233
        %v2526 = vpop.f32.mrf.mxu0
        %v2527 = vadd.f32 %v2175, %v2526
        %v2528 = vpop.f32.mrf.mxu0
        %2529 = vmatprep.mubr.f32.mxu0 0.0
        %2530 = vmatmul.mubr.f32.gmra.mxu0 %v2236
        %v2531 = vpop.f32.mrf.mxu0
        %v2532 = vadd.f32 %v2175, %v2531
        %v2533 = vpop.f32.mrf.mxu0
        %2534 = vmatprep.mubr.f32.mxu0 0.0
        %2535 = vmatmul.mubr.f32.gmra.mxu0 %v2239
        %v2536 = vpop.f32.mrf.mxu0
        %v2537 = vadd.f32 %v2175, %v2536
        %v2538 = vpop.f32.mrf.mxu0
        %2539 = vmatprep.mubr.f32.mxu0 0.0
        %2540 = vmatmul.mubr.f32.gmra.mxu0 %v2242
        %v2541 = vpop.f32.mrf.mxu0
        %v2542 = vadd.f32 %v2175, %v2541
        %v2543 = vpop.f32.mrf.mxu0
        %2544 = vmatprep.mubr.f32.mxu0 0.0
        %2545 = vmatmul.mubr.f32.gmra.mxu0 %v2245
        %v2546 = vpop.f32.mrf.mxu0
        %v2547 = vadd.f32 %v2175, %v2546
        %v2548 = vpop.f32.mrf.mxu0
        %2549 = vmatprep.mubr.f32.mxu0 0.0
        %2550 = vmatmul.mubr.f32.gmra.mxu0 %v2248
        %v2551 = vpop.f32.mrf.mxu0
        %v2552 = vadd.f32 %v2175, %v2551
        %v2553 = vpop.f32.mrf.mxu0
        %2554 = vmatprep.mubr.f32.mxu0 0.0
        %2555 = vmatmul.mubr.f32.gmra.mxu0 %v2251
        %v2556 = vpop.f32.mrf.mxu0
        %v2557 = vadd.f32 %v2175, %v2556
        %v2558 = vpop.f32.mrf.mxu0
        %2559 = vmatprep.mubr.f32.mxu0 0.0
        %2560 = vmatmul.mubr.f32.gmra.mxu0 %v2254
        %v2561 = vpop.f32.mrf.mxu0
        %v2562 = vadd.f32 %v2175, %v2561
        %v2563 = vpop.f32.mrf.mxu0
        %2564 = vmatprep.mubr.f32.mxu0 0.0
        %2565 = vmatmul.mubr.f32.gmra.mxu0 %v2257
        %v2566 = vpop.f32.mrf.mxu0
        %v2567 = vadd.f32 %v2175, %v2566
        %v2568 = vpop.f32.mrf.mxu0
        %2569 = vmatprep.mubr.f32.mxu0 0.0
        %2570 = vmatmul.mubr.f32.gmra.mxu0 %v2260
        %v2571 = vpop.f32.mrf.mxu0
        %v2572 = vadd.f32 %v2175, %v2571
        %v2573 = vpop.f32.mrf.mxu0
        %2574 = vmatprep.mubr.f32.mxu0 0.0
        %2575 = vmatmul.mubr.f32.gmra.mxu0 %v2263
        %v2576 = vpop.f32.mrf.mxu0
        %v2577 = vadd.f32 %v2175, %v2576
        %v2578 = vpop.f32.mrf.mxu0
        %2579 = vmatprep.mubr.f32.mxu0 0.0
        %2580 = vmatmul.mubr.f32.gmra.mxu0 %v2266
        %v2581 = vpop.f32.mrf.mxu0
        %v2582 = vadd.f32 %v2175, %v2581
        %v2583 = vpop.f32.mrf.mxu0
        %2584 = vmatprep.mubr.f32.mxu0 0.0
        %2585 = vmatmul.mubr.f32.gmra.mxu0 %v2269
        %v2586 = vpop.f32.mrf.mxu0
        %v2587 = vadd.f32 %v2175, %v2586
        %v2588 = vpop.f32.mrf.mxu0
        %2589 = vmatprep.mubr.f32.mxu0 0.0
        %2590 = vmatmul.mubr.f32.gmra.mxu0 %v2272
        %v2591 = vpop.f32.mrf.mxu0
        %v2592 = vadd.f32 %v2175, %v2591
        %v2593 = vpop.f32.mrf.mxu0
        %2594 = vmatprep.mubr.f32.mxu0 0.0
        %2595 = vmatmul.mubr.f32.gmra.mxu0 %v2275
        %v2596 = vpop.f32.mrf.mxu0
        %v2597 = vadd.f32 %v2175, %v2596
        %v2598 = vpop.f32.mrf.mxu0
        %2599 = vmatprep.mubr.f32.mxu0 0.0
        %2600 = vmatmul.mubr.f32.gmra.mxu0 %v2278
        %v2601 = vpop.f32.mrf.mxu0
        %v2602 = vadd.f32 %v2175, %v2601
        %v2603 = vpop.f32.mrf.mxu0
        %2604 = vmatprep.mubr.f32.mxu0 0.0
        %2605 = vmatmul.mubr.f32.gmra.mxu0 %v2281
        %v2606 = vpop.f32.mrf.mxu0
        %v2607 = vadd.f32 %v2175, %v2606
        %v2608 = vpop.f32.mrf.mxu0
        %2609 = vmatprep.mubr.f32.mxu0 0.0
        %2610 = vmatmul.mubr.f32.gmra.mxu0 %v2284
        %v2611 = vpop.f32.mrf.mxu0
        %v2612 = vadd.f32 %v2175, %v2611
        %v2613 = vpop.f32.mrf.mxu0
        %2614 = vmatprep.mubr.f32.mxu0 0.0
        %2615 = vmatmul.mubr.f32.gmra.mxu0 %v2287
        %v2616 = vpop.f32.mrf.mxu0
        %v2617 = vadd.f32 %v2175, %v2616
        %v2618 = vpop.f32.mrf.mxu0
        %2619 = vmatprep.mubr.f32.mxu0 0.0
        %2620 = vmatmul.mubr.f32.gmra.mxu0 %v2290
        %v2621 = vpop.f32.mrf.mxu0
        %v2622 = vadd.f32 %v2175, %v2621
        %v2623 = vpop.f32.mrf.mxu0
        %2624 = vmatprep.mubr.f32.mxu0 0.0
        %2625 = vmatmul.mubr.f32.gmra.mxu0 %v2293
        %v2626 = vpop.f32.mrf.mxu0
        %v2627 = vadd.f32 %v2175, %v2626
        %v2628 = vpop.f32.mrf.mxu0
        %2629 = vmatprep.mubr.f32.mxu0 0.0
        %2630 = vmatmul.mubr.f32.gmra.mxu0 %v2296
        %v2631 = vpop.f32.mrf.mxu0
        %v2632 = vadd.f32 %v2175, %v2631
        %v2633 = vpop.f32.mrf.mxu0
        %2634 = vmatprep.mubr.f32.mxu0 0.0
        %2635 = vmatmul.mubr.f32.gmra.mxu0 %v2299
        %v2636 = vpop.f32.mrf.mxu0
        %v2637 = vadd.f32 %v2175, %v2636
        %v2638 = vpop.f32.mrf.mxu0
        %2639 = vmatprep.mubr.f32.mxu0 0.0
        %2640 = vmatmul.mubr.f32.gmra.mxu0 %v2302
        %v2641 = vpop.f32.mrf.mxu0
        %v2642 = vadd.f32 %v2175, %v2641
        %v2643 = vpop.f32.mrf.mxu0
        %2644 = vmatprep.mubr.f32.mxu0 0.0
        %2645 = vmatmul.mubr.f32.gmra.mxu0 %v2305
        %v2646 = vpop.f32.mrf.mxu0
        %v2647 = vadd.f32 %v2175, %v2646
        %v2648 = vpop.f32.mrf.mxu0
        %2649 = vmatprep.mubr.f32.mxu0 0.0
        %2650 = vmatmul.mubr.f32.gmra.mxu0 %v2308
        %v2651 = vpop.f32.mrf.mxu0
        %v2652 = vadd.f32 %v2175, %v2651
        %v2653 = vpop.f32.mrf.mxu0
        %2654 = vmatprep.mubr.f32.mxu0 0.0
        %2655 = vmatmul.mubr.f32.gmra.mxu0 %v2311
        %v2656 = vpop.f32.mrf.mxu0
        %v2657 = vadd.f32 %v2175, %v2656
        %v2658 = vpop.f32.mrf.mxu0
        %2659 = vmatprep.mubr.f32.mxu0 0.0
        %2660 = vmatmul.mubr.f32.gmra.mxu0 %v2314
        %v2661 = vpop.f32.mrf.mxu0
        %v2662 = vadd.f32 %v2175, %v2661
        %v2663 = vpop.f32.mrf.mxu0
        %2664 = vmatprep.mubr.f32.mxu0 0.0
        %2665 = vmatmul.mubr.f32.gmra.mxu0 %v2317
        %v2666 = vpop.f32.mrf.mxu0
        %v2667 = vadd.f32 %v2175, %v2666
        %v2668 = vpop.f32.mrf.mxu0
        %2669 = vmatprep.mubr.f32.mxu0 0.0
        %2670 = vmatmul.mubr.f32.gmra.mxu0 %v2320
        %v2671 = vpop.f32.mrf.mxu0
        %v2672 = vadd.f32 %v2175, %v2671
        %v2673 = vpop.f32.mrf.mxu0
        %2674 = vmatprep.mubr.f32.mxu0 0.0
        %2675 = vmatmul.mubr.f32.gmra.mxu0 %v2323
        %v2676 = vpop.f32.mrf.mxu0
        %v2677 = vadd.f32 %v2175, %v2676
        %v2678 = vpop.f32.mrf.mxu0
        %2679 = vmatprep.mubr.f32.mxu0 0.0
        %2680 = vmatmul.mubr.f32.gmra.mxu0 %v2326
        %v2681 = vpop.f32.mrf.mxu0
        %v2682 = vadd.f32 %v2175, %v2681
        %v2683 = vpop.f32.mrf.mxu0
        %2684 = vmatprep.mubr.f32.mxu0 0.0
        %2685 = vmatmul.mubr.f32.gmra.mxu0 %v2329
        %v2686 = vpop.f32.mrf.mxu0
        %v2687 = vadd.f32 %v2175, %v2686
        %v2688 = vpop.f32.mrf.mxu0
        %2689 = vmatprep.mubr.f32.mxu0 0.0
        %2690 = vmatmul.mubr.f32.gmra.mxu0 %v2332
        %v2691 = vpop.f32.mrf.mxu0
        %v2692 = vadd.f32 %v2175, %v2691
        %v2693 = vpop.f32.mrf.mxu0
        %2694 = vmatprep.mubr.f32.mxu0 0.0
        %2695 = vmatmul.mubr.f32.gmra.mxu0 %v2335
        %v2696 = vpop.f32.mrf.mxu0
        %v2697 = vadd.f32 %v2175, %v2696
        %v2698 = vpop.f32.mrf.mxu0
        %2699 = vmatprep.mubr.f32.mxu0 0.0
        %2700 = vmatmul.mubr.f32.gmra.mxu0 %v2338
        %v2701 = vpop.f32.mrf.mxu0
        %v2702 = vadd.f32 %v2175, %v2701
        %v2703 = vpop.f32.mrf.mxu0
        %2704 = vmatprep.mubr.f32.mxu0 0.0
        %2705 = vmatmul.mubr.f32.gmra.mxu0 %v2341
        %v2706 = vpop.f32.mrf.mxu0
        %v2707 = vadd.f32 %v2175, %v2706
        %v2708 = vpop.f32.mrf.mxu0
        %2709 = vmatprep.mubr.f32.mxu0 0.0
        %2710 = vmatmul.mubr.f32.gmra.mxu0 %v2344
        %v2711 = vpop.f32.mrf.mxu0
        %v2712 = vadd.f32 %v2175, %v2711
        %v2713 = vpop.f32.mrf.mxu0
        %2714 = vmatprep.mubr.f32.mxu0 0.0
        %2715 = vmatmul.mubr.f32.gmra.mxu0 %v2347
        %v2716 = vpop.f32.mrf.mxu0
        %v2717 = vadd.f32 %v2175, %v2716
        %v2718 = vpop.f32.mrf.mxu0
        %2719 = vmatprep.mubr.f32.mxu0 0.0
        %2720 = vmatmul.mubr.f32.gmra.mxu0 %v2350
        %v2721 = vpop.f32.mrf.mxu0
        %v2722 = vadd.f32 %v2175, %v2721
        %v2723 = vpop.f32.mrf.mxu0
        %2724 = vmatprep.mubr.f32.mxu0 0.0
        %2725 = vmatmul.mubr.f32.gmra.mxu0 %v2353
        %v2726 = vpop.f32.mrf.mxu0
        %v2727 = vadd.f32 %v2175, %v2726
        %v2728 = vpop.f32.mrf.mxu0
        %2729 = vmatprep.mubr.f32.mxu0 0.0
        %2730 = vmatmul.mubr.f32.gmra.mxu0 %v2356
        %v2731 = vpop.f32.mrf.mxu0
        %v2732 = vadd.f32 %v2175, %v2731
        %v2733 = vpop.f32.mrf.mxu0
        %2734 = vmatprep.mubr.f32.mxu0 0.0
        %2735 = vmatmul.mubr.f32.gmra.mxu0 %v2359
        %v2736 = vpop.f32.mrf.mxu0
        %v2737 = vadd.f32 %v2175, %v2736
        %v2738 = vpop.f32.mrf.mxu0
        %2739 = vmatprep.mubr.f32.mxu0 0.0
        %2740 = vmatmul.mubr.f32.gmra.mxu0 %v2362
        %v2741 = vpop.f32.mrf.mxu0
        %v2742 = vadd.f32 %v2175, %v2741
        %v2743 = vpop.f32.mrf.mxu0
        %2744 = vmatprep.mubr.f32.mxu0 0.0
        %2745 = vmatmul.mubr.f32.gmra.mxu0 %v2365
        %v2746 = vpop.f32.mrf.mxu0
        %v2747 = vadd.f32 %v2175, %v2746
        %v2748 = vpop.f32.mrf.mxu0
        %2749 = vmatprep.mubr.f32.mxu0 0.0
        %2750 = vmatmul.mubr.f32.gmra.mxu0 %v2368
        %v2751 = vpop.f32.mrf.mxu0
        %v2752 = vadd.f32 %v2175, %v2751
        %v2753 = vpop.f32.mrf.mxu0
        %2754 = vdwg.mxu0
        %v2755 = vtanh.pop %v2437
        %v2756 = vtanh.pop %v2442
        %v2757 = vtanh.pop %v2447
        %v2758 = vtanh.pop %v2452
        %v2759 = vtanh.pop %v2457
        %v2760 = vtanh.pop %v2462
        %v2761 = vtanh.pop %v2467
        %v2762 = vtanh.pop %v2472
        %v2763 = vtanh.pop %v2477
        %v2764 = vtanh.pop %v2482
        %v2765 = vtanh.pop %v2487
        %v2766 = vtanh.pop %v2492
        %v2767 = vtanh.pop %v2497
        %v2768 = vtanh.pop %v2502
        %v2769 = vtanh.pop %v2507
        %v2770 = vtanh.pop %v2512
        %v2771 = vtanh.pop %v2517
        %v2772 = vtanh.pop %v2522
        %v2773 = vtanh.pop %v2527
        %v2774 = vtanh.pop %v2532
        %v2775 = vtanh.pop %v2537
        %v2776 = vtanh.pop %v2542
        %v2777 = vtanh.pop %v2547
        %v2778 = vtanh.pop %v2552
        %v2779 = vtanh.pop %v2557
        %v2780 = vtanh.pop %v2562
        %v2781 = vtanh.pop %v2567
        %v2782 = vtanh.pop %v2572
        %v2783 = vtanh.pop %v2577
        %v2784 = vtanh.pop %v2582
        %v2785 = vtanh.pop %v2587
        %v2786 = vtanh.pop %v2592
        %v2787 = vtanh.pop %v2597
        %v2788 = vtanh.pop %v2602
        %v2789 = vtanh.pop %v2607
        %v2790 = vtanh.pop %v2612
        %v2791 = vtanh.pop %v2617
        %v2792 = vtanh.pop %v2622
        %v2793 = vtanh.pop %v2627
        %v2794 = vtanh.pop %v2632
        %v2795 = vtanh.pop %v2637
        %v2796 = vtanh.pop %v2642
        %v2797 = vtanh.pop %v2647
        %v2798 = vtanh.pop %v2652
        %v2799 = vtanh.pop %v2657
        %v2800 = vtanh.pop %v2662
        %v2801 = vtanh.pop %v2667
        %v2802 = vtanh.pop %v2672
        %v2803 = vtanh.pop %v2677
        %v2804 = vtanh.pop %v2682
        %v2805 = vtanh.pop %v2687
        %v2806 = vtanh.pop %v2692
        %v2807 = vtanh.pop %v2697
        %v2808 = vtanh.pop %v2702
        %v2809 = vtanh.pop %v2707
        %v2810 = vtanh.pop %v2712
        %v2811 = vtanh.pop %v2717
        %v2812 = vtanh.pop %v2722
        %v2813 = vtanh.pop %v2727
        %v2814 = vtanh.pop %v2732
        %v2815 = vtanh.pop %v2737
        %v2816 = vtanh.pop %v2742
        %v2817 = vtanh.pop %v2747
        %v2818 = vtanh.pop %v2752
        %v2819 = vld [vmem:[%s7] sm:$0x1]
        %v2820 = vld [vmem:[#allocation2] sm:$0x1]
        %2822 = vset.pattern.permute.xlu0 0
        %2823 = vperm.xlu0 %2822, %v2820
        %v2824 = vpop.permute.xlu0 %2823
        %v2826 = vlaneseq
        %v2827 = vshrl.u32 %v2826, 7
        %v2828 = vsub.s32 0, %v2827
        %v2829 = vrot.slane %v2824, %v2828
        %v2831 = vsel %vm2177, %v2819, 0
        %v2834 = vsel %vm2177, %v2755, 0
        %v2837 = vsel %vm2177, %v2756, 0
        %v2840 = vsel %vm2177, %v2757, 0
        %v2843 = vsel %vm2177, %v2758, 0
        %v2846 = vsel %vm2177, %v2759, 0
        %v2849 = vsel %vm2177, %v2760, 0
        %v2852 = vsel %vm2177, %v2761, 0
        %v2855 = vsel %vm2177, %v2762, 0
        %v2858 = vsel %vm2177, %v2763, 0
        %v2861 = vsel %vm2177, %v2764, 0
        %v2864 = vsel %vm2177, %v2765, 0
        %v2867 = vsel %vm2177, %v2766, 0
        %v2870 = vsel %vm2177, %v2767, 0
        %v2873 = vsel %vm2177, %v2768, 0
        %v2876 = vsel %vm2177, %v2769, 0
        %v2879 = vsel %vm2177, %v2770, 0
        %v2882 = vsel %vm2177, %v2771, 0
        %v2885 = vsel %vm2177, %v2772, 0
        %v2888 = vsel %vm2177, %v2773, 0
        %v2891 = vsel %vm2177, %v2774, 0
        %v2894 = vsel %vm2177, %v2775, 0
        %v2897 = vsel %vm2177, %v2776, 0
        %v2900 = vsel %vm2177, %v2777, 0
        %v2903 = vsel %vm2177, %v2778, 0
        %v2906 = vsel %vm2177, %v2779, 0
        %v2909 = vsel %vm2177, %v2780, 0
        %v2912 = vsel %vm2177, %v2781, 0
        %v2915 = vsel %vm2177, %v2782, 0
        %v2918 = vsel %vm2177, %v2783, 0
        %v2921 = vsel %vm2177, %v2784, 0
        %v2924 = vsel %vm2177, %v2785, 0
        %v2927 = vsel %vm2177, %v2786, 0
        %v2930 = vsel %vm2177, %v2787, 0
        %v2933 = vsel %vm2177, %v2788, 0
        %v2936 = vsel %vm2177, %v2789, 0
        %v2939 = vsel %vm2177, %v2790, 0
        %v2942 = vsel %vm2177, %v2791, 0
        %v2945 = vsel %vm2177, %v2792, 0
        %v2948 = vsel %vm2177, %v2793, 0
        %v2951 = vsel %vm2177, %v2794, 0
        %v2954 = vsel %vm2177, %v2795, 0
        %v2957 = vsel %vm2177, %v2796, 0
        %v2960 = vsel %vm2177, %v2797, 0
        %v2963 = vsel %vm2177, %v2798, 0
        %v2966 = vsel %vm2177, %v2799, 0
        %v2969 = vsel %vm2177, %v2800, 0
        %v2972 = vsel %vm2177, %v2801, 0
        %v2975 = vsel %vm2177, %v2802, 0
        %v2978 = vsel %vm2177, %v2803, 0
        %v2981 = vsel %vm2177, %v2804, 0
        %v2984 = vsel %vm2177, %v2805, 0
        %v2987 = vsel %vm2177, %v2806, 0
        %v2990 = vsel %vm2177, %v2807, 0
        %v2993 = vsel %vm2177, %v2808, 0
        %v2996 = vsel %vm2177, %v2809, 0
        %v2999 = vsel %vm2177, %v2810, 0
        %v3002 = vsel %vm2177, %v2811, 0
        %v3005 = vsel %vm2177, %v2812, 0
        %v3008 = vsel %vm2177, %v2813, 0
        %v3011 = vsel %vm2177, %v2814, 0
        %v3014 = vsel %vm2177, %v2815, 0
        %v3017 = vsel %vm2177, %v2816, 0
        %v3020 = vsel %vm2177, %v2817, 0
        %v3023 = vsel %vm2177, %v2818, 0
        %3025 = vmatprep.subr.mxu0 0.0
        %3026 = vmatpush1.xpose.msra.mxu0 %v2879
        %3027 = vmatprep.subr.mxu0 0.0
        %3028 = vmatpush1.xpose.msra.mxu0 %v2876
        %3029 = vmatprep.subr.mxu0 0.0
        %3030 = vmatpush1.xpose.msra.mxu0 %v2873
        %3031 = vmatprep.subr.mxu0 0.0
        %3032 = vmatpush1.xpose.msra.mxu0 %v2870
        %3033 = vmatprep.subr.mxu0 0.0
        %3034 = vmatpush1.xpose.msra.mxu0 %v2867
        %3035 = vmatprep.subr.mxu0 0.0
        %3036 = vmatpush1.xpose.msra.mxu0 %v2864
        %3037 = vmatprep.subr.mxu0 0.0
        %3038 = vmatpush1.xpose.msra.mxu0 %v2861
        %3039 = vmatprep.subr.mxu0 0.0
        %3040 = vmatpush1.xpose.msra.mxu0 %v2858
        %3041 = vmatprep.subr.mxu0 0.0
        %3042 = vmatpush1.xpose.msra.mxu0 %v2855
        %3043 = vmatprep.subr.mxu0 0.0
        %3044 = vmatpush1.xpose.msra.mxu0 %v2852
        %3045 = vmatprep.subr.mxu0 0.0
        %3046 = vmatpush1.xpose.msra.mxu0 %v2849
        %3047 = vmatprep.subr.mxu0 0.0
        %3048 = vmatpush1.xpose.msra.mxu0 %v2846
        %3049 = vmatprep.subr.mxu0 0.0
        %3050 = vmatpush1.xpose.msra.mxu0 %v2843
        %3051 = vmatprep.subr.mxu0 0.0
        %3052 = vmatpush1.xpose.msra.mxu0 %v2840
        %3053 = vmatprep.subr.mxu0 0.0
        %3054 = vmatpush1.xpose.msra.mxu0 %v2837
        %3055 = vmatprep.subr.mxu0 0.0
        %3056 = vmatpush1.xpose.msra.mxu0 %v2834
        %3057 = vmatprep.subr.mxu0 0.0
        %3058 = vmatpush2.xpose.msra.mxu0 %v2927
        %3059 = vmatprep.subr.mxu0 0.0
        %3060 = vmatpush2.xpose.msra.mxu0 %v2924
        %3061 = vmatprep.subr.mxu0 0.0
        %3062 = vmatpush2.xpose.msra.mxu0 %v2921
        %3063 = vmatprep.subr.mxu0 0.0
        %3064 = vmatpush2.xpose.msra.mxu0 %v2918
        %3065 = vmatprep.subr.mxu0 0.0
        %3066 = vmatpush2.xpose.msra.mxu0 %v2915
        %3067 = vmatprep.subr.mxu0 0.0
        %3068 = vmatpush2.xpose.msra.mxu0 %v2912
        %3069 = vmatprep.subr.mxu0 0.0
        %3070 = vmatpush2.xpose.msra.mxu0 %v2909
        %3071 = vmatprep.subr.mxu0 0.0
        %3072 = vmatpush2.xpose.msra.mxu0 %v2906
        %3073 = vmatprep.subr.mxu0 0.0
        %3074 = vmatpush2.xpose.msra.mxu0 %v2903
        %3075 = vmatprep.subr.mxu0 0.0
        %3076 = vmatpush2.xpose.msra.mxu0 %v2900
        %3077 = vmatprep.subr.mxu0 0.0
        %3078 = vmatpush2.xpose.msra.mxu0 %v2897
        %3079 = vmatprep.subr.mxu0 0.0
        %3080 = vmatpush2.xpose.msra.mxu0 %v2894
        %3081 = vmatprep.subr.mxu0 0.0
        %3082 = vmatpush2.xpose.msra.mxu0 %v2891
        %3083 = vmatprep.subr.mxu0 0.0
        %3084 = vmatpush2.xpose.msra.mxu0 %v2888
        %3085 = vmatprep.subr.mxu0 0.0
        %3086 = vmatpush2.xpose.msra.mxu0 %v2885
        %3087 = vmatprep.subr.mxu0 0.0
        %3088 = vmatpush2.xpose.msra.mxu0 %v2882
        %3089 = vmatprep.mubr.f32.mxu0 0.0
        %3090 = vmatmul.mubr.f32.gmra.mxu0 %v2831
        %v3091 = vpop.f32.mrf.mxu0
        %v3092 = vadd.f32 %v2829, %v3091
        %v3093 = vpop.f32.mrf.mxu0
        %v3094 = vadd.f32 %v2829, %v3093
        %3095 = vdwg.mxu0
        %3096 = vmatprep.subr.mxu0 0.0
        %3097 = vmatpush1.xpose.msra.mxu0 %v2975
        %3098 = vmatprep.subr.mxu0 0.0
        %3099 = vmatpush1.xpose.msra.mxu0 %v2972
        %3100 = vmatprep.subr.mxu0 0.0
        %3101 = vmatpush1.xpose.msra.mxu0 %v2969
        %3102 = vmatprep.subr.mxu0 0.0
        %3103 = vmatpush1.xpose.msra.mxu0 %v2966
        %3104 = vmatprep.subr.mxu0 0.0
        %3105 = vmatpush1.xpose.msra.mxu0 %v2963
        %3106 = vmatprep.subr.mxu0 0.0
        %3107 = vmatpush1.xpose.msra.mxu0 %v2960
        %3108 = vmatprep.subr.mxu0 0.0
        %3109 = vmatpush1.xpose.msra.mxu0 %v2957
        %3110 = vmatprep.subr.mxu0 0.0
        %3111 = vmatpush1.xpose.msra.mxu0 %v2954
        %3112 = vmatprep.subr.mxu0 0.0
        %3113 = vmatpush1.xpose.msra.mxu0 %v2951
        %3114 = vmatprep.subr.mxu0 0.0
        %3115 = vmatpush1.xpose.msra.mxu0 %v2948
        %3116 = vmatprep.subr.mxu0 0.0
        %3117 = vmatpush1.xpose.msra.mxu0 %v2945
        %3118 = vmatprep.subr.mxu0 0.0
        %3119 = vmatpush1.xpose.msra.mxu0 %v2942
        %3120 = vmatprep.subr.mxu0 0.0
        %3121 = vmatpush1.xpose.msra.mxu0 %v2939
        %3122 = vmatprep.subr.mxu0 0.0
        %3123 = vmatpush1.xpose.msra.mxu0 %v2936
        %3124 = vmatprep.subr.mxu0 0.0
        %3125 = vmatpush1.xpose.msra.mxu0 %v2933
        %3126 = vmatprep.subr.mxu0 0.0
        %3127 = vmatpush1.xpose.msra.mxu0 %v2930
        %3128 = vmatprep.subr.mxu0 0.0
        %3129 = vmatpush2.xpose.msra.mxu0 %v3023
        %3130 = vmatprep.subr.mxu0 0.0
        %3131 = vmatpush2.xpose.msra.mxu0 %v3020
        %3132 = vmatprep.subr.mxu0 0.0
        %3133 = vmatpush2.xpose.msra.mxu0 %v3017
        %3134 = vmatprep.subr.mxu0 0.0
        %3135 = vmatpush2.xpose.msra.mxu0 %v3014
        %3136 = vmatprep.subr.mxu0 0.0
        %3137 = vmatpush2.xpose.msra.mxu0 %v3011
        %3138 = vmatprep.subr.mxu0 0.0
        %3139 = vmatpush2.xpose.msra.mxu0 %v3008
        %3140 = vmatprep.subr.mxu0 0.0
        %3141 = vmatpush2.xpose.msra.mxu0 %v3005
        %3142 = vmatprep.subr.mxu0 0.0
        %3143 = vmatpush2.xpose.msra.mxu0 %v3002
        %3144 = vmatprep.subr.mxu0 0.0
        %3145 = vmatpush2.xpose.msra.mxu0 %v2999
        %3146 = vmatprep.subr.mxu0 0.0
        %3147 = vmatpush2.xpose.msra.mxu0 %v2996
        %3148 = vmatprep.subr.mxu0 0.0
        %3149 = vmatpush2.xpose.msra.mxu0 %v2993
        %3150 = vmatprep.subr.mxu0 0.0
        %3151 = vmatpush2.xpose.msra.mxu0 %v2990
        %3152 = vmatprep.subr.mxu0 0.0
        %3153 = vmatpush2.xpose.msra.mxu0 %v2987
        %3154 = vmatprep.subr.mxu0 0.0
        %3155 = vmatpush2.xpose.msra.mxu0 %v2984
        %3156 = vmatprep.subr.mxu0 0.0
        %3157 = vmatpush2.xpose.msra.mxu0 %v2981
        %3158 = vmatprep.subr.mxu0 0.0
        %3159 = vmatpush2.xpose.msra.mxu0 %v2978
        %3160 = vmatprep.mubr.f32.mxu0 0.0
        %3161 = vmatmul.mubr.f32.gmra.mxu0 %v2831
        %v3162 = vpop.f32.mrf.mxu0
        %v3163 = vadd.f32 %v2829, %v3162
        %v3164 = vpop.f32.mrf.mxu0
        %v3165 = vadd.f32 %v2829, %v3164
        %3166 = vdwg.mxu0
        %v3167 = vxor.u32 %v3092, 2147483648
        %v3168 = vxor.u32 %v3094, 2147483648
        %v3169 = vxor.u32 %v3163, 2147483648
        %v3170 = vxor.u32 %v3165, 2147483648
        %v3171 = vmul.f32 %v3167, 1.442695
        %v3172 = vpow.pop %v3171
        %v3173 = vmul.f32 %v3168, 1.442695
        %v3174 = vpow.pop %v3173
        %v3175 = vmul.f32 %v3169, 1.442695
        %v3176 = vpow.pop %v3175
        %v3177 = vmul.f32 %v3170, 1.442695
        %v3178 = vpow.pop %v3177
        %v3179 = vadd.f32 %v3172, 1.0
        %v3180 = vadd.f32 %v3174, 1.0
        %v3181 = vadd.f32 %v3176, 1.0
        %v3182 = vadd.f32 %v3178, 1.0
        %v3183 = vrcp.pop %v3179
        %v3184 = vmul.f32 1.0, %v3183
        %v3185 = vrcp.pop %v3180
        %v3186 = vmul.f32 1.0, %v3185
        %v3187 = vrcp.pop %v3181
        %v3188 = vmul.f32 1.0, %v3187
        %v3189 = vrcp.pop %v3182
        %v3190 = vmul.f32 1.0, %v3189
        %v3195 = vcombine.low %v3184, %v3186
        %v3196 = vcombine.low %v3188, %v3190
        %v3198 = vunpack.c.l.s4 1966171168
        %v3199 = vunpack.c.0.s8 %v3198
        %v3200 = vlaneseq
        %v3201 = vshrl.u32 %v3200, 7
        %v3202 = vsub.s32 %v3199, %v3201
        %v3203 = vrot.slane %v3195, %v3202
        %v3205 = vunpack.c.l.s4 1966171168
        %v3206 = vunpack.c.0.s8 %v3205
        %v3207 = vlaneseq
        %v3208 = vshrl.u32 %v3207, 7
        %v3209 = vsub.s32 %v3206, %v3208
        %v3210 = vrot.slane %v3196, %v3209
        %v3211 = vcombine.low %v3203, %v3210
        %v3213 = vunpack.c.l.s4 1966171168
        %v3214 = vunpack.c.0.s8 %v3213
        %v3215 = vlaneseq
        %v3216 = vshrl.u32 %v3215, 7
        %v3217 = vsub.s32 %v3214, %v3216
        %v3218 = vrot.slane %v3211, %v3217
        %v3220 = vlaneseq
        %vm3221 = vcmp.ge.s32.totalorder %v3220, 0
        %vm3222 = vcmp.lt.s32.totalorder %v3220, 512
        %vm3223 = vmand %vm3221, %vm3222
        %3224 = vst.msk [vmem:[%s344] sm:$0xf] %vm3223, %v3218
        %s3225 = sand.u32 %s232, 1
        %s3226 = scalar_lea.sflag [#allocation4], %s3225
        %s3227 = sand.u32 %s232, 1
        %s3228 = smul.addr %s3227, 4
        %s3229 = scalar_lea.vmem [#allocation3], %s3228
        // Predicated region
        $region57: #{tpu_custom_call.1} parent=55 // pred_check
          %p3230 = pneg %p242
        $region58: #{tpu_custom_call.1} parent=55 // pred_check_branch
          %3232 = sbr.rel (%p3230) target = $region60
        $region59: #{tpu_custom_call.1} parent=55 // pred_region
          %s3233 = smul.u32 4, %s25
          %s3235 = ssub.s32 64, 64
          %3236 = vsyncadd %s3226, %s3235
          %s3237 = smul.addr %s3233, 16
          %s3238 = scalar_lea.hbm %s9, %s3237
          %s3240 = sshll.u32 %s3229, 4
          %s3241 = int_to_ptr.vmem [resolvable:$true] %s3240
          %3243 = dma.vmem_to_hbm [thread:$0]  %s3241, 64, %s3238, %s3226
        $region60: #{tpu_custom_call.1} parent=55 // pred_fallthru
          _
      $region56: #{tpu_custom_call.1} parent=5 // pred_fallthru
        _
      %p3244 = scmp.le.s32.totalorder 2, %s20
      // Predicated region
      $region61: #{tpu_custom_call.1} parent=5 // pred_check
        %p3245 = pneg %p3244
      $region62: #{tpu_custom_call.1} parent=5 // pred_check_branch
        %3247 = sbr.rel (%p3245) target = $region64
      $region63: #{tpu_custom_call.1} parent=5 // pred_region
        %s3248 = ssub.s32 %s20, 2
        // Predicated region
        $region65: #{tpu_custom_call.1} parent=63 // pred_check
          %p3249 = pneg %p248
        $region66: #{tpu_custom_call.1} parent=63 // pred_check_branch
          %3251 = sbr.rel (%p3249) target = $region68
        $region67: #{tpu_custom_call.1} parent=63 // pred_region
          %s3252 = sand.u32 %s233, 1
          %s3253 = scalar_lea.sflag [#allocation4], %s3252
          %s3254 = sand.u32 %s233, 1
          %s3255 = smul.addr %s3254, 4
          %s3256 = scalar_lea.vmem [#allocation3], %s3255
          %3257 = dma.done %s3253, 64
        $region68: #{tpu_custom_call.1} parent=63 // pred_fallthru
          _
      $region64: #{tpu_custom_call.1} parent=5 // pred_fallthru
        _
    $region6: #{tpu_custom_call.1} parent=1 // loop_footer
      %s24 = sadd.s32 1, %s20
    $region7: #{tpu_custom_call.1} parent=1 // loop_footer_branch
      %19 = sbr.rel target = $region3
    $region8: #{tpu_custom_call.1} parent=1 // loop_exit
      _
    %3258 = vsyncpa [#allocation4], 1
    %s3259 = scalar_lea.sflag [#allocation4], 1
    %3260 = vsyncpa %s3259, 1

</llo_original>
